<compile_context>
chip_gen: v7x
topology: tpu7x:2x2x1
jax: 0.10.0
libtpu: 0.0.40
codegen_flags: <defaults>
</compile_context>

<pallas_src>
import jax
import jax.numpy as jnp
from jax.experimental import pallas as pl
from jax.experimental.pallas import tpu as pltpu

D = 512            # patch_embedding_dim (forced by the hard-coded [..., :512] split)
D_HID = D // 4     # 128
D2 = 2 * D         # 1024 (fused feature width)
H2 = 2 * D_HID     # 256  (fused hidden width)
TM_MAX = 1024      # max row tile


def _fused_adapter_kernel(x_ref, w1_ref, b1_ref, w2_ref, b2_ref, high_ref, low_ref):
    # x_ref: (TM, 1024) input dtype   w1_ref: (1024, 256) bf16   b1_ref: (1, 256) f32
    # w2_ref: (256, 1024) bf16        b2_ref: (1, 1024) f32      high/low_ref: (TM, 512)
    x = x_ref[...].astype(jnp.bfloat16)                               # cheap VPU cast -> MXU bf16 rate
    h = jnp.dot(x, w1_ref[...], preferred_element_type=jnp.float32)   # (TM, 256), f32 accumulation
    h = jnp.maximum(h + b1_ref[...], 0.0).astype(jnp.bfloat16)        # f32 bias + ReLU, then bf16 for MXU
    # Second matmul per adapter against static column views of the resident fused W2/b2;
    # block-diagonal weights keep the two adapters independent:
    #   cols [:512] -> adapter_10_high(x[:, :512]),  cols [512:] -> adapter_5_low(x[:, 512:])
    yh = jnp.dot(h, w2_ref[:, :D], preferred_element_type=jnp.float32) + b2_ref[:, :D]
    high_ref[...] = jnp.maximum(yh, 0.0).astype(high_ref.dtype)
    yl = jnp.dot(h, w2_ref[:, D:], preferred_element_type=jnp.float32) + b2_ref[:, D:]
    low_ref[...] = jnp.maximum(yl, 0.0).astype(low_ref.dtype)


def _round_up(x, m):
    return ((x + m - 1) // m) * m


def _row_tile(n_rows, dtype):
    # Sublane multiple is dtype dependent: 8 (f32) / 16 (bf16) / 32 (int8, fp8).
    sub = max(8, 32 // jnp.dtype(dtype).itemsize)
    tm = min(TM_MAX, _round_up(n_rows, sub))
    # If a single block would cover all rows, split into >=2 blocks so the "parallel"
    # grid axis can be sharded across both TensorCores on v7x.
    if tm >= n_rows and n_rows > sub:
        tm = _round_up(-(-n_rows // 2), sub)
    return tm


@jax.jit
def adapter_forward(all_wsi_feats, fused_params):
    """all_wsi_feats: [..., 1024] -> (low_feature [..., 512], high_feature [..., 512])."""
    w1, b1, w2, b2 = fused_params
    lead_shape = all_wsi_feats.shape[:-1]
    x2d = all_wsi_feats.reshape(-1, D2)
    n_rows = x2d.shape[0]

    tm = _row_tile(n_rows, x2d.dtype)
    grid = (pl.cdiv(n_rows, tm),)

    high2d, low2d = pl.pallas_call(
        _fused_adapter_kernel,
        out_shape=(
            jax.ShapeDtypeStruct((n_rows, D), x2d.dtype),
            jax.ShapeDtypeStruct((n_rows, D), x2d.dtype),
        ),
        grid_spec=pltpu.PrefetchScalarGridSpec(
            num_scalar_prefetch=0,
            grid=grid,
            in_specs=[
                pl.BlockSpec((tm, D2), lambda i: (i, 0)),   # x tile (full 1024-wide rows)
                pl.BlockSpec((D2, H2), lambda i: (0, 0)),   # fused W1 (resident, bf16)
                pl.BlockSpec((1, H2), lambda i: (0, 0)),    # fused b1 (f32)
                pl.BlockSpec((H2, D2), lambda i: (0, 0)),   # fused W2 (resident, bf16)
                pl.BlockSpec((1, D2), lambda i: (0, 0)),    # fused b2 (f32)
            ],
            out_specs=[
                pl.BlockSpec((tm, D), lambda i: (i, 0)),    # high output tile (lane-dense)
                pl.BlockSpec((tm, D), lambda i: (i, 0)),    # low output tile (lane-dense)
            ],
        ),
        compiler_params=pltpu.CompilerParams(
            dimension_semantics=("parallel",),
            vmem_limit_bytes=40 * 1024 * 1024,
        ),
    )(x2d, w1, b1, w2, b2)

    low_out = low2d.reshape(*lead_shape, D)
    high_out = high2d.reshape(*lead_shape, D)
    return low_out, high_out


# ---------------------------------------------------------------------------
# Parameter init / fusion helpers
# ---------------------------------------------------------------------------

def _init_linear(key, fan_in, fan_out, dtype=jnp.float32):
    # deterministic init mimicking nn.Linear default (uniform +- 1/sqrt(fan_in))
    kw, kb = jax.random.split(key)
    bound = 1.0 / jnp.sqrt(jnp.float32(fan_in))
    w = jax.random.uniform(kw, (fan_in, fan_out), dtype, -bound, bound)
    b = jax.random.uniform(kb, (1, fan_out), dtype, -bound, bound)
    return w, b


def init_adapter_params(key):
    k = jax.random.split(key, 4)
    # adapter_5_low: Linear(D, D//4) -> ReLU -> Linear(D//4, D) -> ReLU
    low_w1, low_b1 = _init_linear(k[0], D, D_HID)
    low_w2, low_b2 = _init_linear(k[1], D_HID, D)
    # adapter_10_high: same shapes
    high_w1, high_b1 = _init_linear(k[2], D, D_HID)
    high_w2, high_b2 = _init_linear(k[3], D_HID, D)
    return {
        "low": (low_w1, low_b1, low_w2, low_b2),
        "high": (high_w1, high_b1, high_w2, high_b2),
    }


def fuse_adapter_params(params_low, params_high):
    """Block-diagonal fused weights (bf16) + concatenated biases (f32).

    Rows/cols [:512]/[:128] belong to adapter_10_high, the rest to adapter_5_low, so
    output cols [:512] == adapter_10_high(x[:, :512]) and [512:] == adapter_5_low(x[:, 512:]).
    """
    w1l, b1l, w2l, b2l = params_low
    w1h, b1h, w2h, b2h = params_high

    w1 = jnp.zeros((D2, H2), jnp.float32)
    w1 = w1.at[:D, :D_HID].set(w1h).at[D:, D_HID:].set(w1l)
    b1 = jnp.concatenate([b1h, b1l], axis=-1).astype(jnp.float32)      # (1, 256)

    w2 = jnp.zeros((H2, D2), jnp.float32)
    w2 = w2.at[:D_HID, :D].set(w2h).at[D_HID:, D:].set(w2l)
    b2 = jnp.concatenate([b2h, b2l], axis=-1).astype(jnp.float32)      # (1, 1024)
    return w1.astype(jnp.bfloat16), b1, w2.astype(jnp.bfloat16), b2


def _reference(all_wsi_feats, params_low, params_high):
    def mlp(x, w1, b1, w2, b2):
        h = jnp.maximum(x @ w1 + b1, 0.0)
        return jnp.maximum(h @ w2 + b2, 0.0)
    high = all_wsi_feats[..., :D]
    low = all_wsi_feats[..., D:]
    return mlp(low, *params_low), mlp(high, *params_high)


if __name__ == "__main__":
    key = jax.random.PRNGKey(0)
    kp, kx = jax.random.split(key)

    params = init_adapter_params(kp)
    fused = fuse_adapter_params(params["low"], params["high"])

    # small version of data['all_wsi_feats'] (orig [10, 5, 2048, 1024])
    x = jax.random.normal(kx, (2, 2, 8, D2), dtype=jnp.float32)

    low_feat, high_feat = adapter_forward(x, fused)
    jax.block_until_ready((low_feat, high_feat))

    ref_low, ref_high = _reference(x, params["low"], params["high"])
    assert low_feat.shape == (2, 2, 8, D) and high_feat.shape == (2, 2, 8, D)
    # bf16 matmuls with f32 accumulation: loosen tolerance vs the all-f32 reference.
    assert jnp.allclose(low_feat, ref_low, atol=3e-2, rtol=3e-2)
    assert jnp.allclose(high_feat, ref_high, atol=3e-2, rtol=3e-2)

    print("KERNEL_OK")
</pallas_src>

<mosaic_0001>
module attributes {stable_mosaic.version = 11 : i64} {
  func.func @_fused_adapter_kernel(%arg0: i32, %arg1: memref<16x1024xf32, #tpu.memory_space<vmem>>, %arg2: memref<1024x256xbf16, #tpu.memory_space<vmem>>, %arg3: memref<1x256xf32, #tpu.memory_space<vmem>>, %arg4: memref<256x1024xbf16, #tpu.memory_space<vmem>>, %arg5: memref<1x1024xf32, #tpu.memory_space<vmem>>, %arg6: memref<16x512xf32, #tpu.memory_space<vmem>>, %arg7: memref<16x512xf32, #tpu.memory_space<vmem>>) attributes {dimension_semantics = [#tpu.dimension_semantics<parallel>], iteration_bounds = array<i64: 2>, scalar_prefetch = 0 : i64, scratch_operands = 0 : i64, tpu.core_type = #tpu.core_type<tc>, window_params = [{transform_indices = @transform_0, window_bounds = array<i64: 16, 1024>}, {pipeline_mode = #tpu.pipeline_mode<synchronous>, transform_indices = @transform_1, window_bounds = array<i64: 1024, 256>}, {pipeline_mode = #tpu.pipeline_mode<synchronous>, transform_indices = @transform_2, window_bounds = array<i64: 1, 256>}, {pipeline_mode = #tpu.pipeline_mode<synchronous>, transform_indices = @transform_3, window_bounds = array<i64: 256, 1024>}, {pipeline_mode = #tpu.pipeline_mode<synchronous>, transform_indices = @transform_4, window_bounds = array<i64: 1, 1024>}, {transform_indices = @transform_5, window_bounds = array<i64: 16, 512>}, {transform_indices = @transform_6, window_bounds = array<i64: 16, 512>}]} {
    %c0 = arith.constant 0 : index
    %c0_0 = arith.constant 0 : index
    %0 = vector.load %arg1[%c0, %c0_0] : memref<16x1024xf32, #tpu.memory_space<vmem>>, vector<16x1024xf32>
    %1 = arith.truncf %0 : vector<16x1024xf32> to vector<16x1024xbf16>
    %c0_1 = arith.constant 0 : index
    %c0_2 = arith.constant 0 : index
    %2 = vector.load %arg2[%c0_1, %c0_2] : memref<1024x256xbf16, #tpu.memory_space<vmem>>, vector<1024x256xbf16>
    %cst = arith.constant dense<0.000000e+00> : vector<16x256xf32>
    %3 = tpu.matmul %1, %2, %cst {dimension_numbers = #tpu.dot_dimension_numbers<[1], [0], [0], [1], [0, 0, 1, 1], [], []>} : vector<16x1024xbf16>, vector<1024x256xbf16>, vector<16x256xf32> -> vector<16x256xf32>
    %c0_3 = arith.constant 0 : index
    %c0_4 = arith.constant 0 : index
    %4 = vector.load %arg3[%c0_3, %c0_4] : memref<1x256xf32, #tpu.memory_space<vmem>>, vector<1x256xf32>
    %5 = vector.broadcast %4 : vector<1x256xf32> to vector<16x256xf32>
    %6 = arith.addf %3, %5 : vector<16x256xf32>
    %cst_5 = arith.constant 0.000000e+00 : f32
    %7 = vector.broadcast %cst_5 : f32 to vector<16x256xf32>
    %8 = arith.maximumf %6, %7 : vector<16x256xf32>
    %9 = arith.truncf %8 : vector<16x256xf32> to vector<16x256xbf16>
    %c0_6 = arith.constant 0 : index
    %c0_7 = arith.constant 0 : index
    %10 = vector.load %arg4[%c0_6, %c0_7] : memref<256x1024xbf16, #tpu.memory_space<vmem>>, vector<256x512xbf16>
    %cst_8 = arith.constant dense<0.000000e+00> : vector<16x512xf32>
    %11 = tpu.matmul %9, %10, %cst_8 {dimension_numbers = #tpu.dot_dimension_numbers<[1], [0], [0], [1], [0, 0, 1, 1], [], []>} : vector<16x256xbf16>, vector<256x512xbf16>, vector<16x512xf32> -> vector<16x512xf32>
    %c0_9 = arith.constant 0 : index
    %c0_10 = arith.constant 0 : index
    %12 = vector.load %arg5[%c0_9, %c0_10] : memref<1x1024xf32, #tpu.memory_space<vmem>>, vector<1x512xf32>
    %13 = vector.broadcast %12 : vector<1x512xf32> to vector<16x512xf32>
    %14 = arith.addf %11, %13 : vector<16x512xf32>
    %cst_11 = arith.constant 0.000000e+00 : f32
    %15 = vector.broadcast %cst_11 : f32 to vector<16x512xf32>
    %16 = arith.maximumf %14, %15 : vector<16x512xf32>
    %c0_12 = arith.constant 0 : index
    %c0_13 = arith.constant 0 : index
    %17 = vector.load %arg6[%c0_12, %c0_13] : memref<16x512xf32, #tpu.memory_space<vmem>>, vector<16x512xf32>
    tpu.vector_store %arg6[%c0_12, %c0_13], %16 {strides = array<i32>} : memref<16x512xf32, #tpu.memory_space<vmem>>, vector<16x512xf32>,
    %c0_14 = arith.constant 0 : index
    %c512 = arith.constant 512 : index
    %18 = vector.load %arg4[%c0_14, %c512] : memref<256x1024xbf16, #tpu.memory_space<vmem>>, vector<256x512xbf16>
    %cst_15 = arith.constant dense<0.000000e+00> : vector<16x512xf32>
    %19 = tpu.matmul %9, %18, %cst_15 {dimension_numbers = #tpu.dot_dimension_numbers<[1], [0], [0], [1], [0, 0, 1, 1], [], []>} : vector<16x256xbf16>, vector<256x512xbf16>, vector<16x512xf32> -> vector<16x512xf32>
    %c0_16 = arith.constant 0 : index
    %c512_17 = arith.constant 512 : index
    %20 = vector.load %arg5[%c0_16, %c512_17] : memref<1x1024xf32, #tpu.memory_space<vmem>>, vector<1x512xf32>
    %21 = vector.broadcast %20 : vector<1x512xf32> to vector<16x512xf32>
    %22 = arith.addf %19, %21 : vector<16x512xf32>
    %cst_18 = arith.constant 0.000000e+00 : f32
    %23 = vector.broadcast %cst_18 : f32 to vector<16x512xf32>
    %24 = arith.maximumf %22, %23 : vector<16x512xf32>
    %c0_19 = arith.constant 0 : index
    %c0_20 = arith.constant 0 : index
    %25 = vector.load %arg7[%c0_19, %c0_20] : memref<16x512xf32, #tpu.memory_space<vmem>>, vector<16x512xf32>
    tpu.vector_store %arg7[%c0_19, %c0_20], %24 {strides = array<i32>} : memref<16x512xf32, #tpu.memory_space<vmem>>, vector<16x512xf32>,
    return
  }
  func.func @transform_0(%arg0: i32) -> (i32, i32) {
    %c0_i32 = arith.constant 0 : i32
    %c0_i32_0 = arith.constant 0 : i32
    return %arg0, %c0_i32 : i32, i32
  }
  func.func @transform_1(%arg0: i32) -> (i32, i32) {
    %c0_i32 = arith.constant 0 : i32
    %c0_i32_0 = arith.constant 0 : i32
    %c0_i32_1 = arith.constant 0 : i32
    return %c0_i32, %c0_i32_0 : i32, i32
  }
  func.func @transform_2(%arg0: i32) -> (i32, i32) {
    %c0_i32 = arith.constant 0 : i32
    %c0_i32_0 = arith.constant 0 : i32
    %c0_i32_1 = arith.constant 0 : i32
    return %c0_i32, %c0_i32_0 : i32, i32
  }
  func.func @transform_3(%arg0: i32) -> (i32, i32) {
    %c0_i32 = arith.constant 0 : i32
    %c0_i32_0 = arith.constant 0 : i32
    %c0_i32_1 = arith.constant 0 : i32
    return %c0_i32, %c0_i32_0 : i32, i32
  }
  func.func @transform_4(%arg0: i32) -> (i32, i32) {
    %c0_i32 = arith.constant 0 : i32
    %c0_i32_0 = arith.constant 0 : i32
    %c0_i32_1 = arith.constant 0 : i32
    return %c0_i32, %c0_i32_0 : i32, i32
  }
  func.func @transform_5(%arg0: i32) -> (i32, i32) {
    %c0_i32 = arith.constant 0 : i32
    %c0_i32_0 = arith.constant 0 : i32
    return %arg0, %c0_i32 : i32, i32
  }
  func.func @transform_6(%arg0: i32) -> (i32, i32) {
    %c0_i32 = arith.constant 0 : i32
    %c0_i32_0 = arith.constant 0 : i32
    return %arg0, %c0_i32 : i32, i32
  }
}

</mosaic_0001>

<llo_original>
// kernel: adapter_forward.1
$region0: #{adapter_forward.1}
  #allocation0 [shape = 'u32[]', space=smem, size = 0x4, offset = 0x4, fixed_abs, tag = 'smem constant byte address 0x4 - core index']
  #allocation1 [shape = 'u32[144,128]{1,0:T(1,128)}', space=vmem, size = 0x12000, scoped, tag = 'internal scratch']
  %s0 = inlined_call_operand.hbm [shape: f32[32,1024], index: 0, kind: input, shape index: {}]
  %s1 = inlined_call_operand.hbm [shape: bf16[1024,256], index: 1, kind: input, shape index: {}]
  %s2 = inlined_call_operand.vmem [shape: f32[1,256], index: 2, kind: input, shape index: {}]
  %s3 = inlined_call_operand.hbm [shape: bf16[256,1024], index: 3, kind: input, shape index: {}]
  %s4 = inlined_call_operand.vmem [shape: f32[1,1024], index: 4, kind: input, shape index: {}]
  %s5 = inlined_call_operand.hbm [shape: f32[32,512], index: 5, kind: output, shape index: {0}]
  %s6 = inlined_call_operand.hbm [shape: f32[32,512], index: 6, kind: output, shape index: {1}]
  %7 = xla_tuple %s5, %s6
  %s8 = sld [smem:[#allocation0]]
  $region73: #{adapter_forward.1} parent=0
    _
  %s10 = ssub.s32 1, %s8
  %s11 = scalar_select 0, %s10, %s8
  $region1: #{adapter_forward.1} parent=0
    #allocation2 [shape = 'u8[131072]{0}', space=vmem, size = 0x20000, scoped, tag = 'input window, operand 0']
    #allocation3 [shape = 's32[2]{0}', space=sflag, size = 0x8, scoped, tag = 'scoped memory for adapter_forward.1']
    #allocation4 [shape = 's32[2]{0}', space=sflag, size = 0x8, scoped, tag = 'scoped memory for adapter_forward.1']
    #allocation5 [shape = 'u8[524288]{0}', space=vmem, size = 0x80000, scoped, tag = 'input window, operand 1, single buffered']
    #allocation6 [shape = 's32[1]{0}', space=sflag, size = 0x4, scoped, tag = 'scoped memory for adapter_forward.1']
    #allocation7 [shape = 'u8[524288]{0}', space=vmem, size = 0x80000, scoped, tag = 'input window, operand 3, single buffered']
    #allocation8 [shape = 'u8[65536]{0}', space=vmem, size = 0x10000, scoped, tag = 'output window, operand 0']
    #allocation9 [shape = 'u8[65536]{0}', space=vmem, size = 0x10000, scoped, tag = 'output window, operand 1']
    #allocation10 [shape = 's32[2]{0}', space=sflag, size = 0x8, scoped, tag = 'scoped memory for adapter_forward.1']
    %12 = vsyncpa [#allocation3], 0
    %s13 = scalar_lea.sflag [#allocation3], 1
    %14 = vsyncpa %s13, 0
    %15 = vsyncpa [#allocation6], 0
    %16 = vsyncpa [#allocation4], 0
    %s17 = scalar_lea.sflag [#allocation4], 1
    %18 = vsyncpa %s17, 0
    %19 = vsyncpa [#allocation10], 0
    %s20 = scalar_lea.sflag [#allocation10], 1
    %21 = vsyncpa %s20, 0
    loop: start=0, step=1, limit=4
    $region2: #{adapter_forward.1} parent=1 // loop_pre_header
      _
    $region3: #{adapter_forward.1} parent=1 // loop_header
      %s23 = sphi 0, %s27
      %p24 = scmp.ge.s32.totalorder %s23, 4
      %s33 = sphi 0, %s35
      %s36 = sphi 0, %s33
      %s37 = sphi 0, %s36
      %s53 = sphi 0, %s37
      %s57 = sphi 0, %s57
      %s59 = sphi 0, %s57
      %s60 = sphi 0, %s59
      %s74 = sphi 0, %s60
      %s78 = sphi 0, %s78
      %s80 = sphi 0, %s78
      %s81 = sphi 0, %s80
      %s95 = sphi 0, %s81
      %s99 = sphi 0, %s99
      %s101 = sphi 0, %s99
      %s102 = sphi 0, %s101
      %s116 = sphi 0, %s102
      %s120 = sphi 0, %s120
      %s122 = sphi 0, %s120
      %s123 = sphi 0, %s122
      %s137 = sphi 0, %s123
      %s143 = sphi 0, %s145
      %s146 = sphi 0, %s143
      %s147 = sphi 0, %s146
      %s163 = sphi 0, %s147
      %s169 = sphi 0, %s171
      %s172 = sphi 0, %s169
      %s173 = sphi 0, %s172
      %s189 = sphi 0, %s173
    $region4: #{adapter_forward.1} parent=1 // loop_header_branch
      %26 = sbr.rel (%p24) target = $region8
    $region5: #{adapter_forward.1} parent=1 // loop_body
      %s28 = ssub.s32 %s23, 1
      %s29 = ssub.s32 %s23, 2
      %s30 = sadd.s32 %s23, 1
      %s31 = ssub.s32 %s23, %s30
      %p32 = scmp.eq.s32.totalorder %s31, 0
      %s34 = sadd.s32 %s33, 1
      %s35 = scalar_select %p32, %s33, %s34
      %p38 = pneg %p32
      %p39 = scmp.eq.s32.totalorder %s23, 1
      %p40 = por %p38, %p39
      %p41 = scmp.ne.s32.totalorder %s33, %s36
      %p42 = scmp.eq.s32.totalorder %s23, 0
      %p43 = por %p41, %p42
      %p44 = scmp.ne.s32.totalorder %s33, %s36
      %p45 = scmp.eq.s32.totalorder %s28, 1
      %p46 = por %p44, %p45
      %p47 = scmp.ne.s32.totalorder %s36, %s37
      %p48 = scmp.eq.s32.totalorder %s28, 0
      %p49 = por %p47, %p48
      %p50 = scmp.ne.s32.totalorder %s36, %s37
      %p51 = scmp.eq.s32.totalorder %s29, 1
      %p52 = por %p50, %p51
      %p54 = scmp.ne.s32.totalorder %s37, %s53
      %p55 = scmp.eq.s32.totalorder %s29, 0
      %p56 = por %p54, %p55
      %s58 = sadd.s32 %s57, 1
      %p61 = scmp.eq.s32.totalorder %s23, 1
      %p62 = scmp.ne.s32.totalorder %s57, %s59
      %p63 = scmp.eq.s32.totalorder %s23, 0
      %p64 = por %p62, %p63
      %p65 = scmp.ne.s32.totalorder %s57, %s59
      %p66 = scmp.eq.s32.totalorder %s28, 1
      %p67 = por %p65, %p66
      %p68 = scmp.ne.s32.totalorder %s59, %s60
      %p69 = scmp.eq.s32.totalorder %s28, 0
      %p70 = por %p68, %p69
      %p71 = scmp.ne.s32.totalorder %s59, %s60
      %p72 = scmp.eq.s32.totalorder %s29, 1
      %p73 = por %p71, %p72
      %p75 = scmp.ne.s32.totalorder %s60, %s74
      %p76 = scmp.eq.s32.totalorder %s29, 0
      %p77 = por %p75, %p76
      %s79 = sadd.s32 %s78, 1
      %p82 = scmp.eq.s32.totalorder %s23, 1
      %p83 = scmp.ne.s32.totalorder %s78, %s80
      %p84 = scmp.eq.s32.totalorder %s23, 0
      %p85 = por %p83, %p84
      %p86 = scmp.ne.s32.totalorder %s78, %s80
      %p87 = scmp.eq.s32.totalorder %s28, 1
      %p88 = por %p86, %p87
      %p89 = scmp.ne.s32.totalorder %s80, %s81
      %p90 = scmp.eq.s32.totalorder %s28, 0
      %p91 = por %p89, %p90
      %p92 = scmp.ne.s32.totalorder %s80, %s81
      %p93 = scmp.eq.s32.totalorder %s29, 1
      %p94 = por %p92, %p93
      %p96 = scmp.ne.s32.totalorder %s81, %s95
      %p97 = scmp.eq.s32.totalorder %s29, 0
      %p98 = por %p96, %p97
      %s100 = sadd.s32 %s99, 1
      %p103 = scmp.eq.s32.totalorder %s23, 1
      %p104 = scmp.ne.s32.totalorder %s99, %s101
      %p105 = scmp.eq.s32.totalorder %s23, 0
      %p106 = por %p104, %p105
      %p107 = scmp.ne.s32.totalorder %s99, %s101
      %p108 = scmp.eq.s32.totalorder %s28, 1
      %p109 = por %p107, %p108
      %p110 = scmp.ne.s32.totalorder %s101, %s102
      %p111 = scmp.eq.s32.totalorder %s28, 0
      %p112 = por %p110, %p111
      %p113 = scmp.ne.s32.totalorder %s101, %s102
      %p114 = scmp.eq.s32.totalorder %s29, 1
      %p115 = por %p113, %p114
      %p117 = scmp.ne.s32.totalorder %s102, %s116
      %p118 = scmp.eq.s32.totalorder %s29, 0
      %p119 = por %p117, %p118
      %s121 = sadd.s32 %s120, 1
      %p124 = scmp.eq.s32.totalorder %s23, 1
      %p125 = scmp.ne.s32.totalorder %s120, %s122
      %p126 = scmp.eq.s32.totalorder %s23, 0
      %p127 = por %p125, %p126
      %p128 = scmp.ne.s32.totalorder %s120, %s122
      %p129 = scmp.eq.s32.totalorder %s28, 1
      %p130 = por %p128, %p129
      %p131 = scmp.ne.s32.totalorder %s122, %s123
      %p132 = scmp.eq.s32.totalorder %s28, 0
      %p133 = por %p131, %p132
      %p134 = scmp.ne.s32.totalorder %s122, %s123
      %p135 = scmp.eq.s32.totalorder %s29, 1
      %p136 = por %p134, %p135
      %p138 = scmp.ne.s32.totalorder %s123, %s137
      %p139 = scmp.eq.s32.totalorder %s29, 0
      %p140 = por %p138, %p139
      %s141 = ssub.s32 %s23, %s30
      %p142 = scmp.eq.s32.totalorder %s141, 0
      %s144 = sadd.s32 %s143, 1
      %s145 = scalar_select %p142, %s143, %s144
      %p148 = pneg %p142
      %p149 = scmp.eq.s32.totalorder %s23, 1
      %p150 = por %p148, %p149
      %p151 = scmp.ne.s32.totalorder %s143, %s146
      %p152 = scmp.eq.s32.totalorder %s23, 0
      %p153 = por %p151, %p152
      %p154 = scmp.ne.s32.totalorder %s143, %s146
      %p155 = scmp.eq.s32.totalorder %s28, 1
      %p156 = por %p154, %p155
      %p157 = scmp.ne.s32.totalorder %s146, %s147
      %p158 = scmp.eq.s32.totalorder %s28, 0
      %p159 = por %p157, %p158
      %p160 = scmp.ne.s32.totalorder %s146, %s147
      %p161 = scmp.eq.s32.totalorder %s29, 1
      %p162 = por %p160, %p161
      %p164 = scmp.ne.s32.totalorder %s147, %s163
      %p165 = scmp.eq.s32.totalorder %s29, 0
      %p166 = por %p164, %p165
      %s167 = ssub.s32 %s23, %s30
      %p168 = scmp.eq.s32.totalorder %s167, 0
      %s170 = sadd.s32 %s169, 1
      %s171 = scalar_select %p168, %s169, %s170
      %p174 = pneg %p168
      %p175 = scmp.eq.s32.totalorder %s23, 1
      %p176 = por %p174, %p175
      %p177 = scmp.ne.s32.totalorder %s169, %s172
      %p178 = scmp.eq.s32.totalorder %s23, 0
      %p179 = por %p177, %p178
      %p180 = scmp.ne.s32.totalorder %s169, %s172
      %p181 = scmp.eq.s32.totalorder %s28, 1
      %p182 = por %p180, %p181
      %p183 = scmp.ne.s32.totalorder %s172, %s173
      %p184 = scmp.eq.s32.totalorder %s28, 0
      %p185 = por %p183, %p184
      %p186 = scmp.ne.s32.totalorder %s172, %s173
      %p187 = scmp.eq.s32.totalorder %s29, 1
      %p188 = por %p186, %p187
      %p190 = scmp.ne.s32.totalorder %s173, %s189
      %p191 = scmp.eq.s32.totalorder %s29, 0
      %p192 = por %p190, %p191
      %p193 = scmp.le.s32.totalorder 1, %s23
      %p194 = scmp.lt.s32.totalorder %s23, 3
      %p195 = pnand %p193, %p194
      %p196 = pneg %p195
      // Predicated region
      $region9: #{adapter_forward.1} parent=5 // pred_check
        _
      $region10: #{adapter_forward.1} parent=5 // pred_check_branch
        %198 = sbr.rel (%p195) target = $region12
      $region11: #{adapter_forward.1} parent=5 // pred_region
        %s199 = ssub.s32 %s23, 1
        // Predicated region
        $region13: #{adapter_forward.1} parent=11 // pred_check
          %p200 = pneg %p70
        $region14: #{adapter_forward.1} parent=11 // pred_check_branch
          %202 = sbr.rel (%p200) target = $region16
        $region15: #{adapter_forward.1} parent=11 // pred_region
          %s204 = ssub.s32 16384, 16384
          %205 = vsyncadd [#allocation6], %s204
          %s206 = sshll.u32 [#allocation5], 4
          %s207 = int_to_ptr.vmem [resolvable:$true] %s206
          %212 = dma.hbm_to_vmem [thread:$0]  %s1, 16384, %s207, [#allocation6], 128, 128, 8
        $region16: #{adapter_forward.1} parent=11 // pred_fallthru
          _
        // Predicated region
        $region17: #{adapter_forward.1} parent=11 // pred_check
          %p213 = pneg %p91
        $region18: #{adapter_forward.1} parent=11 // pred_check_branch
          %215 = sbr.rel (%p213) target = $region20
        $region19: #{adapter_forward.1} parent=11 // pred_region
          _
        $region20: #{adapter_forward.1} parent=11 // pred_fallthru
          _
        // Predicated region
        $region21: #{adapter_forward.1} parent=11 // pred_check
          %p216 = pneg %p112
        $region22: #{adapter_forward.1} parent=11 // pred_check_branch
          %218 = sbr.rel (%p216) target = $region24
        $region23: #{adapter_forward.1} parent=11 // pred_region
          %s220 = ssub.s32 16384, 16384
          %221 = vsyncadd [#allocation6], %s220
          %s222 = sshll.u32 [#allocation7], 4
          %s223 = int_to_ptr.vmem [resolvable:$true] %s222
          %228 = dma.hbm_to_vmem [thread:$0]  %s3, 16384, %s223, [#allocation6], 512, 512, 32
        $region24: #{adapter_forward.1} parent=11 // pred_fallthru
          _
        // Predicated region
        $region25: #{adapter_forward.1} parent=11 // pred_check
          %p229 = pneg %p133
        $region26: #{adapter_forward.1} parent=11 // pred_check_branch
          %231 = sbr.rel (%p229) target = $region28
        $region27: #{adapter_forward.1} parent=11 // pred_region
          _
        $region28: #{adapter_forward.1} parent=11 // pred_fallthru
          _
      $region12: #{adapter_forward.1} parent=5 // pred_fallthru
        _
      %p232 = scmp.lt.s32.totalorder %s23, 2
      // Predicated region
      $region29: #{adapter_forward.1} parent=5 // pred_check
        %p233 = pneg %p232
      $region30: #{adapter_forward.1} parent=5 // pred_check_branch
        %235 = sbr.rel (%p233) target = $region32
      $region31: #{adapter_forward.1} parent=5 // pred_region
        // Predicated region
        $region33: #{adapter_forward.1} parent=31 // pred_check
          %p236 = pneg %p43
        $region34: #{adapter_forward.1} parent=31 // pred_check_branch
          %238 = sbr.rel (%p236) target = $region36
        $region35: #{adapter_forward.1} parent=31 // pred_region
          %s239 = sand.u32 %s33, 1
          %s240 = scalar_lea.sflag [#allocation3], %s239
          %s241 = sand.u32 %s33, 1
          %s242 = smul.addr %s241, 128
          %s243 = scalar_lea.vmem [#allocation2], %s242
          %s244 = smul.u32 2, %s23
          %s246 = ssub.s32 2048, 2048
          %247 = vsyncadd %s240, %s246
          %s248 = smul.addr %s244, 8
          %s249 = smul.addr %s248, 128
          %s250 = scalar_lea.hbm %s0, %s249
          %s251 = sshll.u32 %s243, 4
          %s252 = int_to_ptr.vmem [resolvable:$true] %s251
          %257 = dma.hbm_to_vmem [thread:$0]  %s250, 2048, %s252, %s240, 1024, 1024, 64
        $region36: #{adapter_forward.1} parent=31 // pred_fallthru
          _
      $region32: #{adapter_forward.1} parent=5 // pred_fallthru
        _
      %p258 = scmp.le.s32.totalorder 1, %s23
      %p259 = scmp.lt.s32.totalorder %s23, 3
      %p260 = pnand %p258, %p259
      %p261 = pneg %p260
      // Predicated region
      $region37: #{adapter_forward.1} parent=5 // pred_check
        _
      $region38: #{adapter_forward.1} parent=5 // pred_check_branch
        %263 = sbr.rel (%p260) target = $region40
      $region39: #{adapter_forward.1} parent=5 // pred_region
        %s264 = ssub.s32 %s23, 1
        %s265 = sand.u32 %s36, 1
        %s266 = scalar_lea.sflag [#allocation3], %s265
        %s267 = sand.u32 %s36, 1
        %s268 = smul.addr %s267, 128
        %s269 = scalar_lea.vmem [#allocation2], %s268
        // Predicated region
        $region41: #{adapter_forward.1} parent=39 // pred_check
          %p270 = pneg %p49
        $region42: #{adapter_forward.1} parent=39 // pred_check_branch
          %272 = sbr.rel (%p270) target = $region44
        $region43: #{adapter_forward.1} parent=39 // pred_region
          %273 = dma.done %s266, 2048
        $region44: #{adapter_forward.1} parent=39 // pred_fallthru
          _
        // Predicated region
        $region45: #{adapter_forward.1} parent=39 // pred_check
          %p274 = pneg %p70
        $region46: #{adapter_forward.1} parent=39 // pred_check_branch
          %276 = sbr.rel (%p274) target = $region48
        $region47: #{adapter_forward.1} parent=39 // pred_region
          %277 = dma.done [#allocation6], 16384
        $region48: #{adapter_forward.1} parent=39 // pred_fallthru
          _
        // Predicated region
        $region49: #{adapter_forward.1} parent=39 // pred_check
          %p278 = pneg %p112
        $region50: #{adapter_forward.1} parent=39 // pred_check_branch
          %280 = sbr.rel (%p278) target = $region52
        $region51: #{adapter_forward.1} parent=39 // pred_region
          %281 = dma.done [#allocation6], 16384
        $region52: #{adapter_forward.1} parent=39 // pred_fallthru
          _
        %s282 = sand.u32 %s36, 1
        %s283 = scalar_lea.sflag [#allocation3], %s282
        %s284 = sand.u32 %s36, 1
        %s285 = smul.addr %s284, 128
        %s286 = scalar_lea.vmem [#allocation2], %s285
        %p287 = pneg %p49
        %p288 = pneg %p46
        %p289 = pneg %p70
        %p290 = pneg %p67
        %p291 = pneg %p91
        %p292 = pneg %p88
        %p293 = pneg %p112
        %p294 = pneg %p109
        %p295 = pneg %p133
        %p296 = pneg %p130
        %p297 = pneg %p159
        %p298 = pneg %p156
        %s299 = sand.u32 %s146, 1
        %s300 = scalar_lea.sflag [#allocation4], %s299
        %s301 = sand.u32 %s146, 1
        %s302 = smul.addr %s301, 64
        %s303 = scalar_lea.vmem [#allocation8], %s302
        %p304 = pneg %p185
        %p305 = pneg %p182
        %s306 = sand.u32 %s172, 1
        %s307 = scalar_lea.sflag [#allocation10], %s306
        %s308 = sand.u32 %s172, 1
        %s309 = smul.addr %s308, 64
        %s310 = scalar_lea.vmem [#allocation9], %s309
        %s311 = smul.u32 2, %s28
        %s312 = smul.u32 2, %s28
        %s313 = smul.u32 2, %s28
        %v314 = vld [vmem:[%s269] sm:$0xff]
        %v315 = vld [vmem:[%s269 + $0x8] sm:$0xff]
        %v316 = vld [vmem:[%s269 + $0x10] sm:$0xff]
        %v317 = vld [vmem:[%s269 + $0x18] sm:$0xff]
        %v318 = vld [vmem:[%s269 + $0x20] sm:$0xff]
        %v319 = vld [vmem:[%s269 + $0x28] sm:$0xff]
        %v320 = vld [vmem:[%s269 + $0x30] sm:$0xff]
        %v321 = vld [vmem:[%s269 + $0x38] sm:$0xff]
        %v322 = vld [vmem:[%s269 + $0x40] sm:$0xff]
        %v323 = vld [vmem:[%s269 + $0x48] sm:$0xff]
        %v324 = vld [vmem:[%s269 + $0x50] sm:$0xff]
        %v325 = vld [vmem:[%s269 + $0x58] sm:$0xff]
        %v326 = vld [vmem:[%s269 + $0x60] sm:$0xff]
        %v327 = vld [vmem:[%s269 + $0x68] sm:$0xff]
        %v328 = vld [vmem:[%s269 + $0x70] sm:$0xff]
        %v329 = vld [vmem:[%s269 + $0x78] sm:$0xff]
        %v330 = vpack.c.bf16 %v322, %v314
        %v331 = vpack.c.bf16 %v323, %v315
        %v332 = vpack.c.bf16 %v324, %v316
        %v333 = vpack.c.bf16 %v325, %v317
        %v334 = vpack.c.bf16 %v326, %v318
        %v335 = vpack.c.bf16 %v327, %v319
        %v336 = vpack.c.bf16 %v328, %v320
        %v337 = vpack.c.bf16 %v329, %v321
        %v338 = vld [vmem:[#allocation5] sm:$0xff]
        %v339 = vld [vmem:[#allocation5 + $0x8] sm:$0xff]
        %v340 = vld [vmem:[#allocation5 + $0x10] sm:$0xff]
        %v341 = vld [vmem:[#allocation5 + $0x18] sm:$0xff]
        %v342 = vld [vmem:[#allocation5 + $0x20] sm:$0xff]
        %v343 = vld [vmem:[#allocation5 + $0x28] sm:$0xff]
        %v344 = vld [vmem:[#allocation5 + $0x30] sm:$0xff]
        %v345 = vld [vmem:[#allocation5 + $0x38] sm:$0xff]
        %v346 = vld [vmem:[#allocation5 + $0x40] sm:$0xff]
        %v347 = vld [vmem:[#allocation5 + $0x48] sm:$0xff]
        %v348 = vld [vmem:[#allocation5 + $0x50] sm:$0xff]
        %v349 = vld [vmem:[#allocation5 + $0x58] sm:$0xff]
        %v350 = vld [vmem:[#allocation5 + $0x60] sm:$0xff]
        %v351 = vld [vmem:[#allocation5 + $0x68] sm:$0xff]
        %v352 = vld [vmem:[#allocation5 + $0x70] sm:$0xff]
        %v353 = vld [vmem:[#allocation5 + $0x78] sm:$0xff]
        %v354 = vld [vmem:[#allocation5 + $0x80] sm:$0xff]
        %v355 = vld [vmem:[#allocation5 + $0x88] sm:$0xff]
        %v356 = vld [vmem:[#allocation5 + $0x90] sm:$0xff]
        %v357 = vld [vmem:[#allocation5 + $0x98] sm:$0xff]
        %v358 = vld [vmem:[#allocation5 + $0xa0] sm:$0xff]
        %v359 = vld [vmem:[#allocation5 + $0xa8] sm:$0xff]
        %v360 = vld [vmem:[#allocation5 + $0xb0] sm:$0xff]
        %v361 = vld [vmem:[#allocation5 + $0xb8] sm:$0xff]
        %v362 = vld [vmem:[#allocation5 + $0xc0] sm:$0xff]
        %v363 = vld [vmem:[#allocation5 + $0xc8] sm:$0xff]
        %v364 = vld [vmem:[#allocation5 + $0xd0] sm:$0xff]
        %v365 = vld [vmem:[#allocation5 + $0xd8] sm:$0xff]
        %v366 = vld [vmem:[#allocation5 + $0xe0] sm:$0xff]
        %v367 = vld [vmem:[#allocation5 + $0xe8] sm:$0xff]
        %v368 = vld [vmem:[#allocation5 + $0xf0] sm:$0xff]
        %v369 = vld [vmem:[#allocation5 + $0xf8] sm:$0xff]
        %v370 = vld [vmem:[#allocation5 + $0x100] sm:$0xff]
        %v371 = vld [vmem:[#allocation5 + $0x108] sm:$0xff]
        %v372 = vld [vmem:[#allocation5 + $0x110] sm:$0xff]
        %v373 = vld [vmem:[#allocation5 + $0x118] sm:$0xff]
        %v374 = vld [vmem:[#allocation5 + $0x120] sm:$0xff]
        %v375 = vld [vmem:[#allocation5 + $0x128] sm:$0xff]
        %v376 = vld [vmem:[#allocation5 + $0x130] sm:$0xff]
        %v377 = vld [vmem:[#allocation5 + $0x138] sm:$0xff]
        %v378 = vld [vmem:[#allocation5 + $0x140] sm:$0xff]
        %v379 = vld [vmem:[#allocation5 + $0x148] sm:$0xff]
        %v380 = vld [vmem:[#allocation5 + $0x150] sm:$0xff]
        %v381 = vld [vmem:[#allocation5 + $0x158] sm:$0xff]
        %v382 = vld [vmem:[#allocation5 + $0x160] sm:$0xff]
        %v383 = vld [vmem:[#allocation5 + $0x168] sm:$0xff]
        %v384 = vld [vmem:[#allocation5 + $0x170] sm:$0xff]
        %v385 = vld [vmem:[#allocation5 + $0x178] sm:$0xff]
        %v386 = vld [vmem:[#allocation5 + $0x180] sm:$0xff]
        %v387 = vld [vmem:[#allocation5 + $0x188] sm:$0xff]
        %v388 = vld [vmem:[#allocation5 + $0x190] sm:$0xff]
        %v389 = vld [vmem:[#allocation5 + $0x198] sm:$0xff]
        %v390 = vld [vmem:[#allocation5 + $0x1a0] sm:$0xff]
        %v391 = vld [vmem:[#allocation5 + $0x1a8] sm:$0xff]
        %v392 = vld [vmem:[#allocation5 + $0x1b0] sm:$0xff]
        %v393 = vld [vmem:[#allocation5 + $0x1b8] sm:$0xff]
        %v394 = vld [vmem:[#allocation5 + $0x1c0] sm:$0xff]
        %v395 = vld [vmem:[#allocation5 + $0x1c8] sm:$0xff]
        %v396 = vld [vmem:[#allocation5 + $0x1d0] sm:$0xff]
        %v397 = vld [vmem:[#allocation5 + $0x1d8] sm:$0xff]
        %v398 = vld [vmem:[#allocation5 + $0x1e0] sm:$0xff]
        %v399 = vld [vmem:[#allocation5 + $0x1e8] sm:$0xff]
        %v400 = vld [vmem:[#allocation5 + $0x1f0] sm:$0xff]
        %v401 = vld [vmem:[#allocation5 + $0x1f8] sm:$0xff]
        %v402 = vld [vmem:[#allocation5 + $0x200] sm:$0xff]
        %v403 = vld [vmem:[#allocation5 + $0x208] sm:$0xff]
        %v404 = vld [vmem:[#allocation5 + $0x210] sm:$0xff]
        %v405 = vld [vmem:[#allocation5 + $0x218] sm:$0xff]
        %v406 = vld [vmem:[#allocation5 + $0x220] sm:$0xff]
        %v407 = vld [vmem:[#allocation5 + $0x228] sm:$0xff]
        %v408 = vld [vmem:[#allocation5 + $0x230] sm:$0xff]
        %v409 = vld [vmem:[#allocation5 + $0x238] sm:$0xff]
        %v410 = vld [vmem:[#allocation5 + $0x240] sm:$0xff]
        %v411 = vld [vmem:[#allocation5 + $0x248] sm:$0xff]
        %v412 = vld [vmem:[#allocation5 + $0x250] sm:$0xff]
        %v413 = vld [vmem:[#allocation5 + $0x258] sm:$0xff]
        %v414 = vld [vmem:[#allocation5 + $0x260] sm:$0xff]
        %v415 = vld [vmem:[#allocation5 + $0x268] sm:$0xff]
        %v416 = vld [vmem:[#allocation5 + $0x270] sm:$0xff]
        %v417 = vld [vmem:[#allocation5 + $0x278] sm:$0xff]
        %v418 = vld [vmem:[#allocation5 + $0x280] sm:$0xff]
        %v419 = vld [vmem:[#allocation5 + $0x288] sm:$0xff]
        %v420 = vld [vmem:[#allocation5 + $0x290] sm:$0xff]
        %v421 = vld [vmem:[#allocation5 + $0x298] sm:$0xff]
        %v422 = vld [vmem:[#allocation5 + $0x2a0] sm:$0xff]
        %v423 = vld [vmem:[#allocation5 + $0x2a8] sm:$0xff]
        %v424 = vld [vmem:[#allocation5 + $0x2b0] sm:$0xff]
        %v425 = vld [vmem:[#allocation5 + $0x2b8] sm:$0xff]
        %v426 = vld [vmem:[#allocation5 + $0x2c0] sm:$0xff]
        %v427 = vld [vmem:[#allocation5 + $0x2c8] sm:$0xff]
        %v428 = vld [vmem:[#allocation5 + $0x2d0] sm:$0xff]
        %v429 = vld [vmem:[#allocation5 + $0x2d8] sm:$0xff]
        %v430 = vld [vmem:[#allocation5 + $0x2e0] sm:$0xff]
        %v431 = vld [vmem:[#allocation5 + $0x2e8] sm:$0xff]
        %v432 = vld [vmem:[#allocation5 + $0x2f0] sm:$0xff]
        %v433 = vld [vmem:[#allocation5 + $0x2f8] sm:$0xff]
        %v434 = vld [vmem:[#allocation5 + $0x300] sm:$0xff]
        %v435 = vld [vmem:[#allocation5 + $0x308] sm:$0xff]
        %v436 = vld [vmem:[#allocation5 + $0x310] sm:$0xff]
        %v437 = vld [vmem:[#allocation5 + $0x318] sm:$0xff]
        %v438 = vld [vmem:[#allocation5 + $0x320] sm:$0xff]
        %v439 = vld [vmem:[#allocation5 + $0x328] sm:$0xff]
        %v440 = vld [vmem:[#allocation5 + $0x330] sm:$0xff]
        %v441 = vld [vmem:[#allocation5 + $0x338] sm:$0xff]
        %v442 = vld [vmem:[#allocation5 + $0x340] sm:$0xff]
        %v443 = vld [vmem:[#allocation5 + $0x348] sm:$0xff]
        %v444 = vld [vmem:[#allocation5 + $0x350] sm:$0xff]
        %v445 = vld [vmem:[#allocation5 + $0x358] sm:$0xff]
        %v446 = vld [vmem:[#allocation5 + $0x360] sm:$0xff]
        %v447 = vld [vmem:[#allocation5 + $0x368] sm:$0xff]
        %v448 = vld [vmem:[#allocation5 + $0x370] sm:$0xff]
        %v449 = vld [vmem:[#allocation5 + $0x378] sm:$0xff]
        %v450 = vld [vmem:[#allocation5 + $0x380] sm:$0xff]
        %v451 = vld [vmem:[#allocation5 + $0x388] sm:$0xff]
        %v452 = vld [vmem:[#allocation5 + $0x390] sm:$0xff]
        %v453 = vld [vmem:[#allocation5 + $0x398] sm:$0xff]
        %v454 = vld [vmem:[#allocation5 + $0x3a0] sm:$0xff]
        %v455 = vld [vmem:[#allocation5 + $0x3a8] sm:$0xff]
        %v456 = vld [vmem:[#allocation5 + $0x3b0] sm:$0xff]
        %v457 = vld [vmem:[#allocation5 + $0x3b8] sm:$0xff]
        %v458 = vld [vmem:[#allocation5 + $0x3c0] sm:$0xff]
        %v459 = vld [vmem:[#allocation5 + $0x3c8] sm:$0xff]
        %v460 = vld [vmem:[#allocation5 + $0x3d0] sm:$0xff]
        %v461 = vld [vmem:[#allocation5 + $0x3d8] sm:$0xff]
        %v462 = vld [vmem:[#allocation5 + $0x3e0] sm:$0xff]
        %v463 = vld [vmem:[#allocation5 + $0x3e8] sm:$0xff]
        %v464 = vld [vmem:[#allocation5 + $0x3f0] sm:$0xff]
        %v465 = vld [vmem:[#allocation5 + $0x3f8] sm:$0xff]
        %v466 = vld [vmem:[%s2] sm:$0x3]
        %v468 = vlaneseq
        %v469 = vshrl.u32 %v468, 7
        %v470 = vsub.s32 0, %v469
        %v471 = vrot.slane %v466, %v470
        %v472 = vlaneseq
        %v473 = vshrl.u32 %v472, 7
        %v474 = vsub.s32 1, %v473
        %v475 = vrot.slane %v466, %v474
        %v606 = vunpack.c.l.b16 %v338
        %v607 = vunpack.c.h.b16 %v338
        %v608 = vunpack.c.l.b16 %v339
        %v609 = vunpack.c.h.b16 %v339
        %v610 = vunpack.c.l.b16 %v340
        %v611 = vunpack.c.h.b16 %v340
        %v612 = vunpack.c.l.b16 %v341
        %v613 = vunpack.c.h.b16 %v341
        %v614 = vunpack.c.l.b16 %v342
        %v615 = vunpack.c.h.b16 %v342
        %v616 = vunpack.c.l.b16 %v343
        %v617 = vunpack.c.h.b16 %v343
        %v618 = vunpack.c.l.b16 %v344
        %v619 = vunpack.c.h.b16 %v344
        %v620 = vunpack.c.l.b16 %v345
        %v621 = vunpack.c.h.b16 %v345
        %v622 = vunpack.c.l.b16 %v346
        %v623 = vunpack.c.h.b16 %v346
        %v624 = vunpack.c.l.b16 %v347
        %v625 = vunpack.c.h.b16 %v347
        %v626 = vunpack.c.l.b16 %v348
        %v627 = vunpack.c.h.b16 %v348
        %v628 = vunpack.c.l.b16 %v349
        %v629 = vunpack.c.h.b16 %v349
        %v630 = vunpack.c.l.b16 %v350
        %v631 = vunpack.c.h.b16 %v350
        %v632 = vunpack.c.l.b16 %v351
        %v633 = vunpack.c.h.b16 %v351
        %v634 = vunpack.c.l.b16 %v352
        %v635 = vunpack.c.h.b16 %v352
        %v636 = vunpack.c.l.b16 %v353
        %v637 = vunpack.c.h.b16 %v353
        %v638 = vunpack.c.l.b16 %v354
        %v639 = vunpack.c.h.b16 %v354
        %v640 = vunpack.c.l.b16 %v355
        %v641 = vunpack.c.h.b16 %v355
        %v642 = vunpack.c.l.b16 %v356
        %v643 = vunpack.c.h.b16 %v356
        %v644 = vunpack.c.l.b16 %v357
        %v645 = vunpack.c.h.b16 %v357
        %v646 = vunpack.c.l.b16 %v358
        %v647 = vunpack.c.h.b16 %v358
        %v648 = vunpack.c.l.b16 %v359
        %v649 = vunpack.c.h.b16 %v359
        %v650 = vunpack.c.l.b16 %v360
        %v651 = vunpack.c.h.b16 %v360
        %v652 = vunpack.c.l.b16 %v361
        %v653 = vunpack.c.h.b16 %v361
        %v654 = vunpack.c.l.b16 %v362
        %v655 = vunpack.c.h.b16 %v362
        %v656 = vunpack.c.l.b16 %v363
        %v657 = vunpack.c.h.b16 %v363
        %v658 = vunpack.c.l.b16 %v364
        %v659 = vunpack.c.h.b16 %v364
        %v660 = vunpack.c.l.b16 %v365
        %v661 = vunpack.c.h.b16 %v365
        %v662 = vunpack.c.l.b16 %v366
        %v663 = vunpack.c.h.b16 %v366
        %v664 = vunpack.c.l.b16 %v367
        %v665 = vunpack.c.h.b16 %v367
        %v666 = vunpack.c.l.b16 %v368
        %v667 = vunpack.c.h.b16 %v368
        %v668 = vunpack.c.l.b16 %v369
        %v669 = vunpack.c.h.b16 %v369
        %v670 = vunpack.c.l.b16 %v370
        %v671 = vunpack.c.h.b16 %v370
        %v672 = vunpack.c.l.b16 %v371
        %v673 = vunpack.c.h.b16 %v371
        %v674 = vunpack.c.l.b16 %v372
        %v675 = vunpack.c.h.b16 %v372
        %v676 = vunpack.c.l.b16 %v373
        %v677 = vunpack.c.h.b16 %v373
        %v678 = vunpack.c.l.b16 %v374
        %v679 = vunpack.c.h.b16 %v374
        %v680 = vunpack.c.l.b16 %v375
        %v681 = vunpack.c.h.b16 %v375
        %v682 = vunpack.c.l.b16 %v376
        %v683 = vunpack.c.h.b16 %v376
        %v684 = vunpack.c.l.b16 %v377
        %v685 = vunpack.c.h.b16 %v377
        %v686 = vunpack.c.l.b16 %v378
        %v687 = vunpack.c.h.b16 %v378
        %v688 = vunpack.c.l.b16 %v379
        %v689 = vunpack.c.h.b16 %v379
        %v690 = vunpack.c.l.b16 %v380
        %v691 = vunpack.c.h.b16 %v380
        %v692 = vunpack.c.l.b16 %v381
        %v693 = vunpack.c.h.b16 %v381
        %v694 = vunpack.c.l.b16 %v382
        %v695 = vunpack.c.h.b16 %v382
        %v696 = vunpack.c.l.b16 %v383
        %v697 = vunpack.c.h.b16 %v383
        %v698 = vunpack.c.l.b16 %v384
        %v699 = vunpack.c.h.b16 %v384
        %v700 = vunpack.c.l.b16 %v385
        %v701 = vunpack.c.h.b16 %v385
        %v702 = vunpack.c.l.b16 %v386
        %v703 = vunpack.c.h.b16 %v386
        %v704 = vunpack.c.l.b16 %v387
        %v705 = vunpack.c.h.b16 %v387
        %v706 = vunpack.c.l.b16 %v388
        %v707 = vunpack.c.h.b16 %v388
        %v708 = vunpack.c.l.b16 %v389
        %v709 = vunpack.c.h.b16 %v389
        %v710 = vunpack.c.l.b16 %v390
        %v711 = vunpack.c.h.b16 %v390
        %v712 = vunpack.c.l.b16 %v391
        %v713 = vunpack.c.h.b16 %v391
        %v714 = vunpack.c.l.b16 %v392
        %v715 = vunpack.c.h.b16 %v392
        %v716 = vunpack.c.l.b16 %v393
        %v717 = vunpack.c.h.b16 %v393
        %v718 = vunpack.c.l.b16 %v394
        %v719 = vunpack.c.h.b16 %v394
        %v720 = vunpack.c.l.b16 %v395
        %v721 = vunpack.c.h.b16 %v395
        %v722 = vunpack.c.l.b16 %v396
        %v723 = vunpack.c.h.b16 %v396
        %v724 = vunpack.c.l.b16 %v397
        %v725 = vunpack.c.h.b16 %v397
        %v726 = vunpack.c.l.b16 %v398
        %v727 = vunpack.c.h.b16 %v398
        %v728 = vunpack.c.l.b16 %v399
        %v729 = vunpack.c.h.b16 %v399
        %v730 = vunpack.c.l.b16 %v400
        %v731 = vunpack.c.h.b16 %v400
        %v732 = vunpack.c.l.b16 %v401
        %v733 = vunpack.c.h.b16 %v401
        %v734 = vunpack.c.l.b16 %v402
        %v735 = vunpack.c.h.b16 %v402
        %v736 = vunpack.c.l.b16 %v403
        %v737 = vunpack.c.h.b16 %v403
        %v738 = vunpack.c.l.b16 %v404
        %v739 = vunpack.c.h.b16 %v404
        %v740 = vunpack.c.l.b16 %v405
        %v741 = vunpack.c.h.b16 %v405
        %v742 = vunpack.c.l.b16 %v406
        %v743 = vunpack.c.h.b16 %v406
        %v744 = vunpack.c.l.b16 %v407
        %v745 = vunpack.c.h.b16 %v407
        %v746 = vunpack.c.l.b16 %v408
        %v747 = vunpack.c.h.b16 %v408
        %v748 = vunpack.c.l.b16 %v409
        %v749 = vunpack.c.h.b16 %v409
        %v750 = vunpack.c.l.b16 %v410
        %v751 = vunpack.c.h.b16 %v410
        %v752 = vunpack.c.l.b16 %v411
        %v753 = vunpack.c.h.b16 %v411
        %v754 = vunpack.c.l.b16 %v412
        %v755 = vunpack.c.h.b16 %v412
        %v756 = vunpack.c.l.b16 %v413
        %v757 = vunpack.c.h.b16 %v413
        %v758 = vunpack.c.l.b16 %v414
        %v759 = vunpack.c.h.b16 %v414
        %v760 = vunpack.c.l.b16 %v415
        %v761 = vunpack.c.h.b16 %v415
        %v762 = vunpack.c.l.b16 %v416
        %v763 = vunpack.c.h.b16 %v416
        %v764 = vunpack.c.l.b16 %v417
        %v765 = vunpack.c.h.b16 %v417
        %v766 = vunpack.c.l.b16 %v418
        %v767 = vunpack.c.h.b16 %v418
        %v768 = vunpack.c.l.b16 %v419
        %v769 = vunpack.c.h.b16 %v419
        %v770 = vunpack.c.l.b16 %v420
        %v771 = vunpack.c.h.b16 %v420
        %v772 = vunpack.c.l.b16 %v421
        %v773 = vunpack.c.h.b16 %v421
        %v774 = vunpack.c.l.b16 %v422
        %v775 = vunpack.c.h.b16 %v422
        %v776 = vunpack.c.l.b16 %v423
        %v777 = vunpack.c.h.b16 %v423
        %v778 = vunpack.c.l.b16 %v424
        %v779 = vunpack.c.h.b16 %v424
        %v780 = vunpack.c.l.b16 %v425
        %v781 = vunpack.c.h.b16 %v425
        %v782 = vunpack.c.l.b16 %v426
        %v783 = vunpack.c.h.b16 %v426
        %v784 = vunpack.c.l.b16 %v427
        %v785 = vunpack.c.h.b16 %v427
        %v786 = vunpack.c.l.b16 %v428
        %v787 = vunpack.c.h.b16 %v428
        %v788 = vunpack.c.l.b16 %v429
        %v789 = vunpack.c.h.b16 %v429
        %v790 = vunpack.c.l.b16 %v430
        %v791 = vunpack.c.h.b16 %v430
        %v792 = vunpack.c.l.b16 %v431
        %v793 = vunpack.c.h.b16 %v431
        %v794 = vunpack.c.l.b16 %v432
        %v795 = vunpack.c.h.b16 %v432
        %v796 = vunpack.c.l.b16 %v433
        %v797 = vunpack.c.h.b16 %v433
        %v798 = vunpack.c.l.b16 %v434
        %v799 = vunpack.c.h.b16 %v434
        %v800 = vunpack.c.l.b16 %v435
        %v801 = vunpack.c.h.b16 %v435
        %v802 = vunpack.c.l.b16 %v436
        %v803 = vunpack.c.h.b16 %v436
        %v804 = vunpack.c.l.b16 %v437
        %v805 = vunpack.c.h.b16 %v437
        %v806 = vunpack.c.l.b16 %v438
        %v807 = vunpack.c.h.b16 %v438
        %v808 = vunpack.c.l.b16 %v439
        %v809 = vunpack.c.h.b16 %v439
        %v810 = vunpack.c.l.b16 %v440
        %v811 = vunpack.c.h.b16 %v440
        %v812 = vunpack.c.l.b16 %v441
        %v813 = vunpack.c.h.b16 %v441
        %v814 = vunpack.c.l.b16 %v442
        %v815 = vunpack.c.h.b16 %v442
        %v816 = vunpack.c.l.b16 %v443
        %v817 = vunpack.c.h.b16 %v443
        %v818 = vunpack.c.l.b16 %v444
        %v819 = vunpack.c.h.b16 %v444
        %v820 = vunpack.c.l.b16 %v445
        %v821 = vunpack.c.h.b16 %v445
        %v822 = vunpack.c.l.b16 %v446
        %v823 = vunpack.c.h.b16 %v446
        %v824 = vunpack.c.l.b16 %v447
        %v825 = vunpack.c.h.b16 %v447
        %v826 = vunpack.c.l.b16 %v448
        %v827 = vunpack.c.h.b16 %v448
        %v828 = vunpack.c.l.b16 %v449
        %v829 = vunpack.c.h.b16 %v449
        %v830 = vunpack.c.l.b16 %v450
        %v831 = vunpack.c.h.b16 %v450
        %v832 = vunpack.c.l.b16 %v451
        %v833 = vunpack.c.h.b16 %v451
        %v834 = vunpack.c.l.b16 %v452
        %v835 = vunpack.c.h.b16 %v452
        %v836 = vunpack.c.l.b16 %v453
        %v837 = vunpack.c.h.b16 %v453
        %v838 = vunpack.c.l.b16 %v454
        %v839 = vunpack.c.h.b16 %v454
        %v840 = vunpack.c.l.b16 %v455
        %v841 = vunpack.c.h.b16 %v455
        %v842 = vunpack.c.l.b16 %v456
        %v843 = vunpack.c.h.b16 %v456
        %v844 = vunpack.c.l.b16 %v457
        %v845 = vunpack.c.h.b16 %v457
        %v846 = vunpack.c.l.b16 %v458
        %v847 = vunpack.c.h.b16 %v458
        %v848 = vunpack.c.l.b16 %v459
        %v849 = vunpack.c.h.b16 %v459
        %v850 = vunpack.c.l.b16 %v460
        %v851 = vunpack.c.h.b16 %v460
        %v852 = vunpack.c.l.b16 %v461
        %v853 = vunpack.c.h.b16 %v461
        %v854 = vunpack.c.l.b16 %v462
        %v855 = vunpack.c.h.b16 %v462
        %v856 = vunpack.c.l.b16 %v463
        %v857 = vunpack.c.h.b16 %v463
        %v858 = vunpack.c.l.b16 %v464
        %v859 = vunpack.c.h.b16 %v464
        %v860 = vunpack.c.l.b16 %v465
        %v861 = vunpack.c.h.b16 %v465
        %v862 = vpack.c.b16 %v608, %v606
        %v863 = vpack.c.b16 %v609, %v607
        %v864 = vpack.c.b16 %v612, %v610
        %v865 = vpack.c.b16 %v613, %v611
        %v866 = vpack.c.b16 %v616, %v614
        %v867 = vpack.c.b16 %v617, %v615
        %v868 = vpack.c.b16 %v620, %v618
        %v869 = vpack.c.b16 %v621, %v619
        %v870 = vpack.c.b16 %v624, %v622
        %v871 = vpack.c.b16 %v625, %v623
        %v872 = vpack.c.b16 %v628, %v626
        %v873 = vpack.c.b16 %v629, %v627
        %v874 = vpack.c.b16 %v632, %v630
        %v875 = vpack.c.b16 %v633, %v631
        %v876 = vpack.c.b16 %v636, %v634
        %v877 = vpack.c.b16 %v637, %v635
        %v878 = vpack.c.b16 %v640, %v638
        %v879 = vpack.c.b16 %v641, %v639
        %v880 = vpack.c.b16 %v644, %v642
        %v881 = vpack.c.b16 %v645, %v643
        %v882 = vpack.c.b16 %v648, %v646
        %v883 = vpack.c.b16 %v649, %v647
        %v884 = vpack.c.b16 %v652, %v650
        %v885 = vpack.c.b16 %v653, %v651
        %v886 = vpack.c.b16 %v656, %v654
        %v887 = vpack.c.b16 %v657, %v655
        %v888 = vpack.c.b16 %v660, %v658
        %v889 = vpack.c.b16 %v661, %v659
        %v890 = vpack.c.b16 %v664, %v662
        %v891 = vpack.c.b16 %v665, %v663
        %v892 = vpack.c.b16 %v668, %v666
        %v893 = vpack.c.b16 %v669, %v667
        %v894 = vpack.c.b16 %v672, %v670
        %v895 = vpack.c.b16 %v673, %v671
        %v896 = vpack.c.b16 %v676, %v674
        %v897 = vpack.c.b16 %v677, %v675
        %v898 = vpack.c.b16 %v680, %v678
        %v899 = vpack.c.b16 %v681, %v679
        %v900 = vpack.c.b16 %v684, %v682
        %v901 = vpack.c.b16 %v685, %v683
        %v902 = vpack.c.b16 %v688, %v686
        %v903 = vpack.c.b16 %v689, %v687
        %v904 = vpack.c.b16 %v692, %v690
        %v905 = vpack.c.b16 %v693, %v691
        %v906 = vpack.c.b16 %v696, %v694
        %v907 = vpack.c.b16 %v697, %v695
        %v908 = vpack.c.b16 %v700, %v698
        %v909 = vpack.c.b16 %v701, %v699
        %v910 = vpack.c.b16 %v704, %v702
        %v911 = vpack.c.b16 %v705, %v703
        %v912 = vpack.c.b16 %v708, %v706
        %v913 = vpack.c.b16 %v709, %v707
        %v914 = vpack.c.b16 %v712, %v710
        %v915 = vpack.c.b16 %v713, %v711
        %v916 = vpack.c.b16 %v716, %v714
        %v917 = vpack.c.b16 %v717, %v715
        %v918 = vpack.c.b16 %v720, %v718
        %v919 = vpack.c.b16 %v721, %v719
        %v920 = vpack.c.b16 %v724, %v722
        %v921 = vpack.c.b16 %v725, %v723
        %v922 = vpack.c.b16 %v728, %v726
        %v923 = vpack.c.b16 %v729, %v727
        %v924 = vpack.c.b16 %v732, %v730
        %v925 = vpack.c.b16 %v733, %v731
        %v926 = vpack.c.b16 %v736, %v734
        %v927 = vpack.c.b16 %v737, %v735
        %v928 = vpack.c.b16 %v740, %v738
        %v929 = vpack.c.b16 %v741, %v739
        %v930 = vpack.c.b16 %v744, %v742
        %v931 = vpack.c.b16 %v745, %v743
        %v932 = vpack.c.b16 %v748, %v746
        %v933 = vpack.c.b16 %v749, %v747
        %v934 = vpack.c.b16 %v752, %v750
        %v935 = vpack.c.b16 %v753, %v751
        %v936 = vpack.c.b16 %v756, %v754
        %v937 = vpack.c.b16 %v757, %v755
        %v938 = vpack.c.b16 %v760, %v758
        %v939 = vpack.c.b16 %v761, %v759
        %v940 = vpack.c.b16 %v764, %v762
        %v941 = vpack.c.b16 %v765, %v763
        %v942 = vpack.c.b16 %v768, %v766
        %v943 = vpack.c.b16 %v769, %v767
        %v944 = vpack.c.b16 %v772, %v770
        %v945 = vpack.c.b16 %v773, %v771
        %v946 = vpack.c.b16 %v776, %v774
        %v947 = vpack.c.b16 %v777, %v775
        %v948 = vpack.c.b16 %v780, %v778
        %v949 = vpack.c.b16 %v781, %v779
        %v950 = vpack.c.b16 %v784, %v782
        %v951 = vpack.c.b16 %v785, %v783
        %v952 = vpack.c.b16 %v788, %v786
        %v953 = vpack.c.b16 %v789, %v787
        %v954 = vpack.c.b16 %v792, %v790
        %v955 = vpack.c.b16 %v793, %v791
        %v956 = vpack.c.b16 %v796, %v794
        %v957 = vpack.c.b16 %v797, %v795
        %v958 = vpack.c.b16 %v800, %v798
        %v959 = vpack.c.b16 %v801, %v799
        %v960 = vpack.c.b16 %v804, %v802
        %v961 = vpack.c.b16 %v805, %v803
        %v962 = vpack.c.b16 %v808, %v806
        %v963 = vpack.c.b16 %v809, %v807
        %v964 = vpack.c.b16 %v812, %v810
        %v965 = vpack.c.b16 %v813, %v811
        %v966 = vpack.c.b16 %v816, %v814
        %v967 = vpack.c.b16 %v817, %v815
        %v968 = vpack.c.b16 %v820, %v818
        %v969 = vpack.c.b16 %v821, %v819
        %v970 = vpack.c.b16 %v824, %v822
        %v971 = vpack.c.b16 %v825, %v823
        %v972 = vpack.c.b16 %v828, %v826
        %v973 = vpack.c.b16 %v829, %v827
        %v974 = vpack.c.b16 %v832, %v830
        %v975 = vpack.c.b16 %v833, %v831
        %v976 = vpack.c.b16 %v836, %v834
        %v977 = vpack.c.b16 %v837, %v835
        %v978 = vpack.c.b16 %v840, %v838
        %v979 = vpack.c.b16 %v841, %v839
        %v980 = vpack.c.b16 %v844, %v842
        %v981 = vpack.c.b16 %v845, %v843
        %v982 = vpack.c.b16 %v848, %v846
        %v983 = vpack.c.b16 %v849, %v847
        %v984 = vpack.c.b16 %v852, %v850
        %v985 = vpack.c.b16 %v853, %v851
        %v986 = vpack.c.b16 %v856, %v854
        %v987 = vpack.c.b16 %v857, %v855
        %v988 = vpack.c.b16 %v860, %v858
        %v989 = vpack.c.b16 %v861, %v859
        %1118 = vmatprep.subr.bf16.mxu0 %v863
        %1119 = vmatpush1.bf16.msra.mxu0 %v862
        %1120 = vmatprep.subr.bf16.mxu0 %v865
        %1121 = vmatpush1.bf16.msra.mxu0 %v864
        %1122 = vmatprep.subr.bf16.mxu0 %v867
        %1123 = vmatpush1.bf16.msra.mxu0 %v866
        %1124 = vmatprep.subr.bf16.mxu0 %v869
        %1125 = vmatpush1.bf16.msra.mxu0 %v868
        %1126 = vmatprep.subr.bf16.mxu0 %v871
        %1127 = vmatpush1.bf16.msra.mxu0 %v870
        %1128 = vmatprep.subr.bf16.mxu0 %v873
        %1129 = vmatpush1.bf16.msra.mxu0 %v872
        %1130 = vmatprep.subr.bf16.mxu0 %v875
        %1131 = vmatpush1.bf16.msra.mxu0 %v874
        %1132 = vmatprep.subr.bf16.mxu0 %v877
        %1133 = vmatpush1.bf16.msra.mxu0 %v876
        %1134 = vmatprep.subr.bf16.mxu0 %v879
        %1135 = vmatpush1.bf16.msra.mxu0 %v878
        %1136 = vmatprep.subr.bf16.mxu0 %v881
        %1137 = vmatpush1.bf16.msra.mxu0 %v880
        %1138 = vmatprep.subr.bf16.mxu0 %v883
        %1139 = vmatpush1.bf16.msra.mxu0 %v882
        %1140 = vmatprep.subr.bf16.mxu0 %v885
        %1141 = vmatpush1.bf16.msra.mxu0 %v884
        %1142 = vmatprep.subr.bf16.mxu0 %v887
        %1143 = vmatpush1.bf16.msra.mxu0 %v886
        %1144 = vmatprep.subr.bf16.mxu0 %v889
        %1145 = vmatpush1.bf16.msra.mxu0 %v888
        %1146 = vmatprep.subr.bf16.mxu0 %v891
        %1147 = vmatpush1.bf16.msra.mxu0 %v890
        %1148 = vmatprep.subr.bf16.mxu0 %v893
        %1149 = vmatpush1.bf16.msra.mxu0 %v892
        %1150 = vmatprep.mubr.bf16.mxu0 %v331
        %1151 = vmatmul.mubr.bf16.gmra.mrb[0].mxu0 %v330
        %v1152 = vpop.f32.mrb[0].mxu0
        %v1153 = vadd.f32 %v471, %v1152
        %v1154 = vpop.f32.mrb[0].mxu0
        %v1155 = vadd.f32 %v475, %v1154
        %v1156 = vpop.f32.mrb[0].mxu0
        %v1157 = vadd.f32 %v471, %v1156
        %v1158 = vpop.f32.mrb[0].mxu0
        %v1159 = vadd.f32 %v475, %v1158
        %1160 = vdwg.mxu0
        %1161 = vmatprep.subr.bf16.mxu0 %v895
        %1162 = vmatpush1.bf16.msra.mxu0 %v894
        %1163 = vmatprep.subr.bf16.mxu0 %v897
        %1164 = vmatpush1.bf16.msra.mxu0 %v896
        %1165 = vmatprep.subr.bf16.mxu0 %v899
        %1166 = vmatpush1.bf16.msra.mxu0 %v898
        %1167 = vmatprep.subr.bf16.mxu0 %v901
        %1168 = vmatpush1.bf16.msra.mxu0 %v900
        %1169 = vmatprep.subr.bf16.mxu0 %v903
        %1170 = vmatpush1.bf16.msra.mxu0 %v902
        %1171 = vmatprep.subr.bf16.mxu0 %v905
        %1172 = vmatpush1.bf16.msra.mxu0 %v904
        %1173 = vmatprep.subr.bf16.mxu0 %v907
        %1174 = vmatpush1.bf16.msra.mxu0 %v906
        %1175 = vmatprep.subr.bf16.mxu0 %v909
        %1176 = vmatpush1.bf16.msra.mxu0 %v908
        %1177 = vmatprep.subr.bf16.mxu0 %v911
        %1178 = vmatpush1.bf16.msra.mxu0 %v910
        %1179 = vmatprep.subr.bf16.mxu0 %v913
        %1180 = vmatpush1.bf16.msra.mxu0 %v912
        %1181 = vmatprep.subr.bf16.mxu0 %v915
        %1182 = vmatpush1.bf16.msra.mxu0 %v914
        %1183 = vmatprep.subr.bf16.mxu0 %v917
        %1184 = vmatpush1.bf16.msra.mxu0 %v916
        %1185 = vmatprep.subr.bf16.mxu0 %v919
        %1186 = vmatpush1.bf16.msra.mxu0 %v918
        %1187 = vmatprep.subr.bf16.mxu0 %v921
        %1188 = vmatpush1.bf16.msra.mxu0 %v920
        %1189 = vmatprep.subr.bf16.mxu0 %v923
        %1190 = vmatpush1.bf16.msra.mxu0 %v922
        %1191 = vmatprep.subr.bf16.mxu0 %v925
        %1192 = vmatpush1.bf16.msra.mxu0 %v924
        %1193 = vmatprep.mubr.bf16.mxu0 %v333
        %1194 = vmatmul.mubr.bf16.gmra.mrb[0].mxu0 %v332
        %v1195 = vpop.f32.mrb[0].mxu0
        %v1196 = vadd.f32 %v1153, %v1195
        %v1197 = vpop.f32.mrb[0].mxu0
        %v1198 = vadd.f32 %v1155, %v1197
        %v1199 = vpop.f32.mrb[0].mxu0
        %v1200 = vadd.f32 %v1157, %v1199
        %v1201 = vpop.f32.mrb[0].mxu0
        %v1202 = vadd.f32 %v1159, %v1201
        %1203 = vdwg.mxu0
        %1204 = vmatprep.subr.bf16.mxu0 %v927
        %1205 = vmatpush1.bf16.msra.mxu0 %v926
        %1206 = vmatprep.subr.bf16.mxu0 %v929
        %1207 = vmatpush1.bf16.msra.mxu0 %v928
        %1208 = vmatprep.subr.bf16.mxu0 %v931
        %1209 = vmatpush1.bf16.msra.mxu0 %v930
        %1210 = vmatprep.subr.bf16.mxu0 %v933
        %1211 = vmatpush1.bf16.msra.mxu0 %v932
        %1212 = vmatprep.subr.bf16.mxu0 %v935
        %1213 = vmatpush1.bf16.msra.mxu0 %v934
        %1214 = vmatprep.subr.bf16.mxu0 %v937
        %1215 = vmatpush1.bf16.msra.mxu0 %v936
        %1216 = vmatprep.subr.bf16.mxu0 %v939
        %1217 = vmatpush1.bf16.msra.mxu0 %v938
        %1218 = vmatprep.subr.bf16.mxu0 %v941
        %1219 = vmatpush1.bf16.msra.mxu0 %v940
        %1220 = vmatprep.subr.bf16.mxu0 %v943
        %1221 = vmatpush1.bf16.msra.mxu0 %v942
        %1222 = vmatprep.subr.bf16.mxu0 %v945
        %1223 = vmatpush1.bf16.msra.mxu0 %v944
        %1224 = vmatprep.subr.bf16.mxu0 %v947
        %1225 = vmatpush1.bf16.msra.mxu0 %v946
        %1226 = vmatprep.subr.bf16.mxu0 %v949
        %1227 = vmatpush1.bf16.msra.mxu0 %v948
        %1228 = vmatprep.subr.bf16.mxu0 %v951
        %1229 = vmatpush1.bf16.msra.mxu0 %v950
        %1230 = vmatprep.subr.bf16.mxu0 %v953
        %1231 = vmatpush1.bf16.msra.mxu0 %v952
        %1232 = vmatprep.subr.bf16.mxu0 %v955
        %1233 = vmatpush1.bf16.msra.mxu0 %v954
        %1234 = vmatprep.subr.bf16.mxu0 %v957
        %1235 = vmatpush1.bf16.msra.mxu0 %v956
        %1236 = vmatprep.mubr.bf16.mxu0 %v335
        %1237 = vmatmul.mubr.bf16.gmra.mrb[0].mxu0 %v334
        %v1238 = vpop.f32.mrb[0].mxu0
        %v1239 = vadd.f32 %v1196, %v1238
        %v1240 = vpop.f32.mrb[0].mxu0
        %v1241 = vadd.f32 %v1198, %v1240
        %v1242 = vpop.f32.mrb[0].mxu0
        %v1243 = vadd.f32 %v1200, %v1242
        %v1244 = vpop.f32.mrb[0].mxu0
        %v1245 = vadd.f32 %v1202, %v1244
        %1246 = vdwg.mxu0
        %1247 = vmatprep.subr.bf16.mxu0 %v959
        %1248 = vmatpush1.bf16.msra.mxu0 %v958
        %1249 = vmatprep.subr.bf16.mxu0 %v961
        %1250 = vmatpush1.bf16.msra.mxu0 %v960
        %1251 = vmatprep.subr.bf16.mxu0 %v963
        %1252 = vmatpush1.bf16.msra.mxu0 %v962
        %1253 = vmatprep.subr.bf16.mxu0 %v965
        %1254 = vmatpush1.bf16.msra.mxu0 %v964
        %1255 = vmatprep.subr.bf16.mxu0 %v967
        %1256 = vmatpush1.bf16.msra.mxu0 %v966
        %1257 = vmatprep.subr.bf16.mxu0 %v969
        %1258 = vmatpush1.bf16.msra.mxu0 %v968
        %1259 = vmatprep.subr.bf16.mxu0 %v971
        %1260 = vmatpush1.bf16.msra.mxu0 %v970
        %1261 = vmatprep.subr.bf16.mxu0 %v973
        %1262 = vmatpush1.bf16.msra.mxu0 %v972
        %1263 = vmatprep.subr.bf16.mxu0 %v975
        %1264 = vmatpush1.bf16.msra.mxu0 %v974
        %1265 = vmatprep.subr.bf16.mxu0 %v977
        %1266 = vmatpush1.bf16.msra.mxu0 %v976
        %1267 = vmatprep.subr.bf16.mxu0 %v979
        %1268 = vmatpush1.bf16.msra.mxu0 %v978
        %1269 = vmatprep.subr.bf16.mxu0 %v981
        %1270 = vmatpush1.bf16.msra.mxu0 %v980
        %1271 = vmatprep.subr.bf16.mxu0 %v983
        %1272 = vmatpush1.bf16.msra.mxu0 %v982
        %1273 = vmatprep.subr.bf16.mxu0 %v985
        %1274 = vmatpush1.bf16.msra.mxu0 %v984
        %1275 = vmatprep.subr.bf16.mxu0 %v987
        %1276 = vmatpush1.bf16.msra.mxu0 %v986
        %1277 = vmatprep.subr.bf16.mxu0 %v989
        %1278 = vmatpush1.bf16.msra.mxu0 %v988
        %1279 = vmatprep.mubr.bf16.mxu0 %v337
        %1280 = vmatmul.mubr.bf16.gmra.mrb[0].mxu0 %v336
        %v1281 = vpop.f32.mrb[0].mxu0
        %v1282 = vadd.f32 %v1239, %v1281
        %v1283 = vpop.f32.mrb[0].mxu0
        %v1284 = vadd.f32 %v1241, %v1283
        %v1285 = vpop.f32.mrb[0].mxu0
        %v1286 = vadd.f32 %v1243, %v1285
        %v1287 = vpop.f32.mrb[0].mxu0
        %v1288 = vadd.f32 %v1245, %v1287
        %1289 = vdwg.mxu0
        %v1290 = vmax.f32 %v1282, 0.0
        %v1291 = vmax.f32 %v1284, 0.0
        %v1292 = vmax.f32 %v1286, 0.0
        %v1293 = vmax.f32 %v1288, 0.0
        %v1294 = vpack.c.bf16 %v1292, %v1290
        %v1295 = vpack.c.bf16 %v1293, %v1291
        %v1296 = vld [vmem:[#allocation7] sm:$0xff]
        %v1297 = vld [vmem:[#allocation7 + $0x8] sm:$0xff]
        %v1298 = vld [vmem:[#allocation7 + $0x20] sm:$0xff]
        %v1299 = vld [vmem:[#allocation7 + $0x28] sm:$0xff]
        %v1300 = vld [vmem:[#allocation7 + $0x40] sm:$0xff]
        %v1301 = vld [vmem:[#allocation7 + $0x48] sm:$0xff]
        %v1302 = vld [vmem:[#allocation7 + $0x60] sm:$0xff]
        %v1303 = vld [vmem:[#allocation7 + $0x68] sm:$0xff]
        %v1304 = vld [vmem:[#allocation7 + $0x80] sm:$0xff]
        %v1305 = vld [vmem:[#allocation7 + $0x88] sm:$0xff]
        %v1306 = vld [vmem:[#allocation7 + $0xa0] sm:$0xff]
        %v1307 = vld [vmem:[#allocation7 + $0xa8] sm:$0xff]
        %v1308 = vld [vmem:[#allocation7 + $0xc0] sm:$0xff]
        %v1309 = vld [vmem:[#allocation7 + $0xc8] sm:$0xff]
        %v1310 = vld [vmem:[#allocation7 + $0xe0] sm:$0xff]
        %v1311 = vld [vmem:[#allocation7 + $0xe8] sm:$0xff]
        %v1312 = vld [vmem:[#allocation7 + $0x100] sm:$0xff]
        %v1313 = vld [vmem:[#allocation7 + $0x108] sm:$0xff]
        %v1314 = vld [vmem:[#allocation7 + $0x120] sm:$0xff]
        %v1315 = vld [vmem:[#allocation7 + $0x128] sm:$0xff]
        %v1316 = vld [vmem:[#allocation7 + $0x140] sm:$0xff]
        %v1317 = vld [vmem:[#allocation7 + $0x148] sm:$0xff]
        %v1318 = vld [vmem:[#allocation7 + $0x160] sm:$0xff]
        %v1319 = vld [vmem:[#allocation7 + $0x168] sm:$0xff]
        %v1320 = vld [vmem:[#allocation7 + $0x180] sm:$0xff]
        %v1321 = vld [vmem:[#allocation7 + $0x188] sm:$0xff]
        %v1322 = vld [vmem:[#allocation7 + $0x1a0] sm:$0xff]
        %v1323 = vld [vmem:[#allocation7 + $0x1a8] sm:$0xff]
        %v1324 = vld [vmem:[#allocation7 + $0x1c0] sm:$0xff]
        %v1325 = vld [vmem:[#allocation7 + $0x1c8] sm:$0xff]
        %v1326 = vld [vmem:[#allocation7 + $0x1e0] sm:$0xff]
        %v1327 = vld [vmem:[#allocation7 + $0x1e8] sm:$0xff]
        %v1328 = vld [vmem:[#allocation7 + $0x200] sm:$0xff]
        %v1329 = vld [vmem:[#allocation7 + $0x208] sm:$0xff]
        %v1330 = vld [vmem:[#allocation7 + $0x220] sm:$0xff]
        %v1331 = vld [vmem:[#allocation7 + $0x228] sm:$0xff]
        %v1332 = vld [vmem:[#allocation7 + $0x240] sm:$0xff]
        %v1333 = vld [vmem:[#allocation7 + $0x248] sm:$0xff]
        %v1334 = vld [vmem:[#allocation7 + $0x260] sm:$0xff]
        %v1335 = vld [vmem:[#allocation7 + $0x268] sm:$0xff]
        %v1336 = vld [vmem:[#allocation7 + $0x280] sm:$0xff]
        %v1337 = vld [vmem:[#allocation7 + $0x288] sm:$0xff]
        %v1338 = vld [vmem:[#allocation7 + $0x2a0] sm:$0xff]
        %v1339 = vld [vmem:[#allocation7 + $0x2a8] sm:$0xff]
        %v1340 = vld [vmem:[#allocation7 + $0x2c0] sm:$0xff]
        %v1341 = vld [vmem:[#allocation7 + $0x2c8] sm:$0xff]
        %v1342 = vld [vmem:[#allocation7 + $0x2e0] sm:$0xff]
        %v1343 = vld [vmem:[#allocation7 + $0x2e8] sm:$0xff]
        %v1344 = vld [vmem:[#allocation7 + $0x300] sm:$0xff]
        %v1345 = vld [vmem:[#allocation7 + $0x308] sm:$0xff]
        %v1346 = vld [vmem:[#allocation7 + $0x320] sm:$0xff]
        %v1347 = vld [vmem:[#allocation7 + $0x328] sm:$0xff]
        %v1348 = vld [vmem:[#allocation7 + $0x340] sm:$0xff]
        %v1349 = vld [vmem:[#allocation7 + $0x348] sm:$0xff]
        %v1350 = vld [vmem:[#allocation7 + $0x360] sm:$0xff]
        %v1351 = vld [vmem:[#allocation7 + $0x368] sm:$0xff]
        %v1352 = vld [vmem:[#allocation7 + $0x380] sm:$0xff]
        %v1353 = vld [vmem:[#allocation7 + $0x388] sm:$0xff]
        %v1354 = vld [vmem:[#allocation7 + $0x3a0] sm:$0xff]
        %v1355 = vld [vmem:[#allocation7 + $0x3a8] sm:$0xff]
        %v1356 = vld [vmem:[#allocation7 + $0x3c0] sm:$0xff]
        %v1357 = vld [vmem:[#allocation7 + $0x3c8] sm:$0xff]
        %v1358 = vld [vmem:[#allocation7 + $0x3e0] sm:$0xff]
        %v1359 = vld [vmem:[#allocation7 + $0x3e8] sm:$0xff]
        %v1360 = vld [vmem:[%s4] sm:$0xf]
        %v1362 = vlaneseq
        %v1363 = vshrl.u32 %v1362, 7
        %v1364 = vsub.s32 0, %v1363
        %v1365 = vrot.slane %v1360, %v1364
        %v1366 = vlaneseq
        %v1367 = vshrl.u32 %v1366, 7
        %v1368 = vsub.s32 1, %v1367
        %v1369 = vrot.slane %v1360, %v1368
        %v1370 = vlaneseq
        %v1371 = vshrl.u32 %v1370, 7
        %v1372 = vsub.s32 2, %v1371
        %v1373 = vrot.slane %v1360, %v1372
        %v1374 = vlaneseq
        %v1375 = vshrl.u32 %v1374, 7
        %v1376 = vsub.s32 3, %v1375
        %v1377 = vrot.slane %v1360, %v1376
        %v1446 = vunpack.c.l.b16 %v1296
        %v1447 = vunpack.c.h.b16 %v1296
        %v1448 = vunpack.c.l.b16 %v1297
        %v1449 = vunpack.c.h.b16 %v1297
        %v1450 = vunpack.c.l.b16 %v1298
        %v1451 = vunpack.c.h.b16 %v1298
        %v1452 = vunpack.c.l.b16 %v1299
        %v1453 = vunpack.c.h.b16 %v1299
        %v1454 = vunpack.c.l.b16 %v1300
        %v1455 = vunpack.c.h.b16 %v1300
        %v1456 = vunpack.c.l.b16 %v1301
        %v1457 = vunpack.c.h.b16 %v1301
        %v1458 = vunpack.c.l.b16 %v1302
        %v1459 = vunpack.c.h.b16 %v1302
        %v1460 = vunpack.c.l.b16 %v1303
        %v1461 = vunpack.c.h.b16 %v1303
        %v1462 = vunpack.c.l.b16 %v1304
        %v1463 = vunpack.c.h.b16 %v1304
        %v1464 = vunpack.c.l.b16 %v1305
        %v1465 = vunpack.c.h.b16 %v1305
        %v1466 = vunpack.c.l.b16 %v1306
        %v1467 = vunpack.c.h.b16 %v1306
        %v1468 = vunpack.c.l.b16 %v1307
        %v1469 = vunpack.c.h.b16 %v1307
        %v1470 = vunpack.c.l.b16 %v1308
        %v1471 = vunpack.c.h.b16 %v1308
        %v1472 = vunpack.c.l.b16 %v1309
        %v1473 = vunpack.c.h.b16 %v1309
        %v1474 = vunpack.c.l.b16 %v1310
        %v1475 = vunpack.c.h.b16 %v1310
        %v1476 = vunpack.c.l.b16 %v1311
        %v1477 = vunpack.c.h.b16 %v1311
        %v1478 = vunpack.c.l.b16 %v1312
        %v1479 = vunpack.c.h.b16 %v1312
        %v1480 = vunpack.c.l.b16 %v1313
        %v1481 = vunpack.c.h.b16 %v1313
        %v1482 = vunpack.c.l.b16 %v1314
        %v1483 = vunpack.c.h.b16 %v1314
        %v1484 = vunpack.c.l.b16 %v1315
        %v1485 = vunpack.c.h.b16 %v1315
        %v1486 = vunpack.c.l.b16 %v1316
        %v1487 = vunpack.c.h.b16 %v1316
        %v1488 = vunpack.c.l.b16 %v1317
        %v1489 = vunpack.c.h.b16 %v1317
        %v1490 = vunpack.c.l.b16 %v1318
        %v1491 = vunpack.c.h.b16 %v1318
        %v1492 = vunpack.c.l.b16 %v1319
        %v1493 = vunpack.c.h.b16 %v1319
        %v1494 = vunpack.c.l.b16 %v1320
        %v1495 = vunpack.c.h.b16 %v1320
        %v1496 = vunpack.c.l.b16 %v1321
        %v1497 = vunpack.c.h.b16 %v1321
        %v1498 = vunpack.c.l.b16 %v1322
        %v1499 = vunpack.c.h.b16 %v1322
        %v1500 = vunpack.c.l.b16 %v1323
        %v1501 = vunpack.c.h.b16 %v1323
        %v1502 = vunpack.c.l.b16 %v1324
        %v1503 = vunpack.c.h.b16 %v1324
        %v1504 = vunpack.c.l.b16 %v1325
        %v1505 = vunpack.c.h.b16 %v1325
        %v1506 = vunpack.c.l.b16 %v1326
        %v1507 = vunpack.c.h.b16 %v1326
        %v1508 = vunpack.c.l.b16 %v1327
        %v1509 = vunpack.c.h.b16 %v1327
        %v1510 = vunpack.c.l.b16 %v1328
        %v1511 = vunpack.c.h.b16 %v1328
        %v1512 = vunpack.c.l.b16 %v1329
        %v1513 = vunpack.c.h.b16 %v1329
        %v1514 = vunpack.c.l.b16 %v1330
        %v1515 = vunpack.c.h.b16 %v1330
        %v1516 = vunpack.c.l.b16 %v1331
        %v1517 = vunpack.c.h.b16 %v1331
        %v1518 = vunpack.c.l.b16 %v1332
        %v1519 = vunpack.c.h.b16 %v1332
        %v1520 = vunpack.c.l.b16 %v1333
        %v1521 = vunpack.c.h.b16 %v1333
        %v1522 = vunpack.c.l.b16 %v1334
        %v1523 = vunpack.c.h.b16 %v1334
        %v1524 = vunpack.c.l.b16 %v1335
        %v1525 = vunpack.c.h.b16 %v1335
        %v1526 = vunpack.c.l.b16 %v1336
        %v1527 = vunpack.c.h.b16 %v1336
        %v1528 = vunpack.c.l.b16 %v1337
        %v1529 = vunpack.c.h.b16 %v1337
        %v1530 = vunpack.c.l.b16 %v1338
        %v1531 = vunpack.c.h.b16 %v1338
        %v1532 = vunpack.c.l.b16 %v1339
        %v1533 = vunpack.c.h.b16 %v1339
        %v1534 = vunpack.c.l.b16 %v1340
        %v1535 = vunpack.c.h.b16 %v1340
        %v1536 = vunpack.c.l.b16 %v1341
        %v1537 = vunpack.c.h.b16 %v1341
        %v1538 = vunpack.c.l.b16 %v1342
        %v1539 = vunpack.c.h.b16 %v1342
        %v1540 = vunpack.c.l.b16 %v1343
        %v1541 = vunpack.c.h.b16 %v1343
        %v1542 = vunpack.c.l.b16 %v1344
        %v1543 = vunpack.c.h.b16 %v1344
        %v1544 = vunpack.c.l.b16 %v1345
        %v1545 = vunpack.c.h.b16 %v1345
        %v1546 = vunpack.c.l.b16 %v1346
        %v1547 = vunpack.c.h.b16 %v1346
        %v1548 = vunpack.c.l.b16 %v1347
        %v1549 = vunpack.c.h.b16 %v1347
        %v1550 = vunpack.c.l.b16 %v1348
        %v1551 = vunpack.c.h.b16 %v1348
        %v1552 = vunpack.c.l.b16 %v1349
        %v1553 = vunpack.c.h.b16 %v1349
        %v1554 = vunpack.c.l.b16 %v1350
        %v1555 = vunpack.c.h.b16 %v1350
        %v1556 = vunpack.c.l.b16 %v1351
        %v1557 = vunpack.c.h.b16 %v1351
        %v1558 = vunpack.c.l.b16 %v1352
        %v1559 = vunpack.c.h.b16 %v1352
        %v1560 = vunpack.c.l.b16 %v1353
        %v1561 = vunpack.c.h.b16 %v1353
        %v1562 = vunpack.c.l.b16 %v1354
        %v1563 = vunpack.c.h.b16 %v1354
        %v1564 = vunpack.c.l.b16 %v1355
        %v1565 = vunpack.c.h.b16 %v1355
        %v1566 = vunpack.c.l.b16 %v1356
        %v1567 = vunpack.c.h.b16 %v1356
        %v1568 = vunpack.c.l.b16 %v1357
        %v1569 = vunpack.c.h.b16 %v1357
        %v1570 = vunpack.c.l.b16 %v1358
        %v1571 = vunpack.c.h.b16 %v1358
        %v1572 = vunpack.c.l.b16 %v1359
        %v1573 = vunpack.c.h.b16 %v1359
        %v1574 = vpack.c.b16 %v1450, %v1446
        %v1575 = vpack.c.b16 %v1451, %v1447
        %v1576 = vpack.c.b16 %v1452, %v1448
        %v1577 = vpack.c.b16 %v1453, %v1449
        %v1578 = vpack.c.b16 %v1458, %v1454
        %v1579 = vpack.c.b16 %v1459, %v1455
        %v1580 = vpack.c.b16 %v1460, %v1456
        %v1581 = vpack.c.b16 %v1461, %v1457
        %v1582 = vpack.c.b16 %v1466, %v1462
        %v1583 = vpack.c.b16 %v1467, %v1463
        %v1584 = vpack.c.b16 %v1468, %v1464
        %v1585 = vpack.c.b16 %v1469, %v1465
        %v1586 = vpack.c.b16 %v1474, %v1470
        %v1587 = vpack.c.b16 %v1475, %v1471
        %v1588 = vpack.c.b16 %v1476, %v1472
        %v1589 = vpack.c.b16 %v1477, %v1473
        %v1590 = vpack.c.b16 %v1482, %v1478
        %v1591 = vpack.c.b16 %v1483, %v1479
        %v1592 = vpack.c.b16 %v1484, %v1480
        %v1593 = vpack.c.b16 %v1485, %v1481
        %v1594 = vpack.c.b16 %v1490, %v1486
        %v1595 = vpack.c.b16 %v1491, %v1487
        %v1596 = vpack.c.b16 %v1492, %v1488
        %v1597 = vpack.c.b16 %v1493, %v1489
        %v1598 = vpack.c.b16 %v1498, %v1494
        %v1599 = vpack.c.b16 %v1499, %v1495
        %v1600 = vpack.c.b16 %v1500, %v1496
        %v1601 = vpack.c.b16 %v1501, %v1497
        %v1602 = vpack.c.b16 %v1506, %v1502
        %v1603 = vpack.c.b16 %v1507, %v1503
        %v1604 = vpack.c.b16 %v1508, %v1504
        %v1605 = vpack.c.b16 %v1509, %v1505
        %v1606 = vpack.c.b16 %v1514, %v1510
        %v1607 = vpack.c.b16 %v1515, %v1511
        %v1608 = vpack.c.b16 %v1516, %v1512
        %v1609 = vpack.c.b16 %v1517, %v1513
        %v1610 = vpack.c.b16 %v1522, %v1518
        %v1611 = vpack.c.b16 %v1523, %v1519
        %v1612 = vpack.c.b16 %v1524, %v1520
        %v1613 = vpack.c.b16 %v1525, %v1521
        %v1614 = vpack.c.b16 %v1530, %v1526
        %v1615 = vpack.c.b16 %v1531, %v1527
        %v1616 = vpack.c.b16 %v1532, %v1528
        %v1617 = vpack.c.b16 %v1533, %v1529
        %v1618 = vpack.c.b16 %v1538, %v1534
        %v1619 = vpack.c.b16 %v1539, %v1535
        %v1620 = vpack.c.b16 %v1540, %v1536
        %v1621 = vpack.c.b16 %v1541, %v1537
        %v1622 = vpack.c.b16 %v1546, %v1542
        %v1623 = vpack.c.b16 %v1547, %v1543
        %v1624 = vpack.c.b16 %v1548, %v1544
        %v1625 = vpack.c.b16 %v1549, %v1545
        %v1626 = vpack.c.b16 %v1554, %v1550
        %v1627 = vpack.c.b16 %v1555, %v1551
        %v1628 = vpack.c.b16 %v1556, %v1552
        %v1629 = vpack.c.b16 %v1557, %v1553
        %v1630 = vpack.c.b16 %v1562, %v1558
        %v1631 = vpack.c.b16 %v1563, %v1559
        %v1632 = vpack.c.b16 %v1564, %v1560
        %v1633 = vpack.c.b16 %v1565, %v1561
        %v1634 = vpack.c.b16 %v1570, %v1566
        %v1635 = vpack.c.b16 %v1571, %v1567
        %v1636 = vpack.c.b16 %v1572, %v1568
        %v1637 = vpack.c.b16 %v1573, %v1569
        %1702 = vmatprep.subr.bf16.mxu0 %v1575
        %1703 = vmatpush1.bf16.msra.mxu0 %v1574
        %1704 = vmatprep.subr.bf16.mxu0 %v1579
        %1705 = vmatpush1.bf16.msra.mxu0 %v1578
        %1706 = vmatprep.subr.bf16.mxu0 %v1583
        %1707 = vmatpush1.bf16.msra.mxu0 %v1582
        %1708 = vmatprep.subr.bf16.mxu0 %v1587
        %1709 = vmatpush1.bf16.msra.mxu0 %v1586
        %1710 = vmatprep.subr.bf16.mxu0 %v1591
        %1711 = vmatpush1.bf16.msra.mxu0 %v1590
        %1712 = vmatprep.subr.bf16.mxu0 %v1595
        %1713 = vmatpush1.bf16.msra.mxu0 %v1594
        %1714 = vmatprep.subr.bf16.mxu0 %v1599
        %1715 = vmatpush1.bf16.msra.mxu0 %v1598
        %1716 = vmatprep.subr.bf16.mxu0 %v1603
        %1717 = vmatpush1.bf16.msra.mxu0 %v1602
        %1718 = vmatprep.subr.bf16.mxu0 %v1607
        %1719 = vmatpush1.bf16.msra.mxu0 %v1606
        %1720 = vmatprep.subr.bf16.mxu0 %v1611
        %1721 = vmatpush1.bf16.msra.mxu0 %v1610
        %1722 = vmatprep.subr.bf16.mxu0 %v1615
        %1723 = vmatpush1.bf16.msra.mxu0 %v1614
        %1724 = vmatprep.subr.bf16.mxu0 %v1619
        %1725 = vmatpush1.bf16.msra.mxu0 %v1618
        %1726 = vmatprep.subr.bf16.mxu0 %v1623
        %1727 = vmatpush1.bf16.msra.mxu0 %v1622
        %1728 = vmatprep.subr.bf16.mxu0 %v1627
        %1729 = vmatpush1.bf16.msra.mxu0 %v1626
        %1730 = vmatprep.subr.bf16.mxu0 %v1631
        %1731 = vmatpush1.bf16.msra.mxu0 %v1630
        %1732 = vmatprep.subr.bf16.mxu0 %v1635
        %1733 = vmatpush1.bf16.msra.mxu0 %v1634
        %1734 = vmatprep.mubr.bf16.mxu0 %v1295
        %1735 = vmatmul.mubr.bf16.gmra.mrb[0].mxu0 %v1294
        %v1736 = vpop.f32.mrb[0].mxu0
        %v1737 = vadd.f32 %v1365, %v1736
        %v1738 = vpop.f32.mrb[0].mxu0
        %v1739 = vadd.f32 %v1369, %v1738
        %v1740 = vpop.f32.mrb[0].mxu0
        %v1741 = vadd.f32 %v1365, %v1740
        %v1742 = vpop.f32.mrb[0].mxu0
        %v1743 = vadd.f32 %v1369, %v1742
        %1744 = vdwg.mxu0
        %1745 = vmatprep.subr.bf16.mxu0 %v1577
        %1746 = vmatpush1.bf16.msra.mxu0 %v1576
        %1747 = vmatprep.subr.bf16.mxu0 %v1581
        %1748 = vmatpush1.bf16.msra.mxu0 %v1580
        %1749 = vmatprep.subr.bf16.mxu0 %v1585
        %1750 = vmatpush1.bf16.msra.mxu0 %v1584
        %1751 = vmatprep.subr.bf16.mxu0 %v1589
        %1752 = vmatpush1.bf16.msra.mxu0 %v1588
        %1753 = vmatprep.subr.bf16.mxu0 %v1593
        %1754 = vmatpush1.bf16.msra.mxu0 %v1592
        %1755 = vmatprep.subr.bf16.mxu0 %v1597
        %1756 = vmatpush1.bf16.msra.mxu0 %v1596
        %1757 = vmatprep.subr.bf16.mxu0 %v1601
        %1758 = vmatpush1.bf16.msra.mxu0 %v1600
        %1759 = vmatprep.subr.bf16.mxu0 %v1605
        %1760 = vmatpush1.bf16.msra.mxu0 %v1604
        %1761 = vmatprep.subr.bf16.mxu0 %v1609
        %1762 = vmatpush1.bf16.msra.mxu0 %v1608
        %1763 = vmatprep.subr.bf16.mxu0 %v1613
        %1764 = vmatpush1.bf16.msra.mxu0 %v1612
        %1765 = vmatprep.subr.bf16.mxu0 %v1617
        %1766 = vmatpush1.bf16.msra.mxu0 %v1616
        %1767 = vmatprep.subr.bf16.mxu0 %v1621
        %1768 = vmatpush1.bf16.msra.mxu0 %v1620
        %1769 = vmatprep.subr.bf16.mxu0 %v1625
        %1770 = vmatpush1.bf16.msra.mxu0 %v1624
        %1771 = vmatprep.subr.bf16.mxu0 %v1629
        %1772 = vmatpush1.bf16.msra.mxu0 %v1628
        %1773 = vmatprep.subr.bf16.mxu0 %v1633
        %1774 = vmatpush1.bf16.msra.mxu0 %v1632
        %1775 = vmatprep.subr.bf16.mxu0 %v1637
        %1776 = vmatpush1.bf16.msra.mxu0 %v1636
        %1777 = vmatprep.mubr.bf16.mxu0 %v1295
        %1778 = vmatmul.mubr.bf16.gmra.mrb[0].mxu0 %v1294
        %v1779 = vpop.f32.mrb[0].mxu0
        %v1780 = vadd.f32 %v1373, %v1779
        %v1781 = vpop.f32.mrb[0].mxu0
        %v1782 = vadd.f32 %v1377, %v1781
        %v1783 = vpop.f32.mrb[0].mxu0
        %v1784 = vadd.f32 %v1373, %v1783
        %v1785 = vpop.f32.mrb[0].mxu0
        %v1786 = vadd.f32 %v1377, %v1785
        %1787 = vdwg.mxu0
        %v1788 = vmax.f32 %v1737, 0.0
        %v1789 = vmax.f32 %v1739, 0.0
        %v1790 = vmax.f32 %v1780, 0.0
        %v1791 = vmax.f32 %v1782, 0.0
        %v1792 = vmax.f32 %v1741, 0.0
        %v1793 = vmax.f32 %v1743, 0.0
        %v1794 = vmax.f32 %v1784, 0.0
        %v1795 = vmax.f32 %v1786, 0.0
        %1796 = vst [vmem:[%s303] sm:$0xff] %v1788
        %1797 = vst [vmem:[%s303 + $0x8] sm:$0xff] %v1789
        %1798 = vst [vmem:[%s303 + $0x10] sm:$0xff] %v1790
        %1799 = vst [vmem:[%s303 + $0x18] sm:$0xff] %v1791
        %1800 = vst [vmem:[%s303 + $0x20] sm:$0xff] %v1792
        %1801 = vst [vmem:[%s303 + $0x28] sm:$0xff] %v1793
        %1802 = vst [vmem:[%s303 + $0x30] sm:$0xff] %v1794
        %1803 = vst [vmem:[%s303 + $0x38] sm:$0xff] %v1795
        %v1804 = vld [vmem:[#allocation7 + $0x10] sm:$0xff]
        %v1805 = vld [vmem:[#allocation7 + $0x18] sm:$0xff]
        %v1806 = vld [vmem:[#allocation7 + $0x30] sm:$0xff]
        %v1807 = vld [vmem:[#allocation7 + $0x38] sm:$0xff]
        %v1808 = vld [vmem:[#allocation7 + $0x50] sm:$0xff]
        %v1809 = vld [vmem:[#allocation7 + $0x58] sm:$0xff]
        %v1810 = vld [vmem:[#allocation7 + $0x70] sm:$0xff]
        %v1811 = vld [vmem:[#allocation7 + $0x78] sm:$0xff]
        %v1812 = vld [vmem:[#allocation7 + $0x90] sm:$0xff]
        %v1813 = vld [vmem:[#allocation7 + $0x98] sm:$0xff]
        %v1814 = vld [vmem:[#allocation7 + $0xb0] sm:$0xff]
        %v1815 = vld [vmem:[#allocation7 + $0xb8] sm:$0xff]
        %v1816 = vld [vmem:[#allocation7 + $0xd0] sm:$0xff]
        %v1817 = vld [vmem:[#allocation7 + $0xd8] sm:$0xff]
        %v1818 = vld [vmem:[#allocation7 + $0xf0] sm:$0xff]
        %v1819 = vld [vmem:[#allocation7 + $0xf8] sm:$0xff]
        %v1820 = vld [vmem:[#allocation7 + $0x110] sm:$0xff]
        %v1821 = vld [vmem:[#allocation7 + $0x118] sm:$0xff]
        %v1822 = vld [vmem:[#allocation7 + $0x130] sm:$0xff]
        %v1823 = vld [vmem:[#allocation7 + $0x138] sm:$0xff]
        %v1824 = vld [vmem:[#allocation7 + $0x150] sm:$0xff]
        %v1825 = vld [vmem:[#allocation7 + $0x158] sm:$0xff]
        %v1826 = vld [vmem:[#allocation7 + $0x170] sm:$0xff]
        %v1827 = vld [vmem:[#allocation7 + $0x178] sm:$0xff]
        %v1828 = vld [vmem:[#allocation7 + $0x190] sm:$0xff]
        %v1829 = vld [vmem:[#allocation7 + $0x198] sm:$0xff]
        %v1830 = vld [vmem:[#allocation7 + $0x1b0] sm:$0xff]
        %v1831 = vld [vmem:[#allocation7 + $0x1b8] sm:$0xff]
        %v1832 = vld [vmem:[#allocation7 + $0x1d0] sm:$0xff]
        %v1833 = vld [vmem:[#allocation7 + $0x1d8] sm:$0xff]
        %v1834 = vld [vmem:[#allocation7 + $0x1f0] sm:$0xff]
        %v1835 = vld [vmem:[#allocation7 + $0x1f8] sm:$0xff]
        %v1836 = vld [vmem:[#allocation7 + $0x210] sm:$0xff]
        %v1837 = vld [vmem:[#allocation7 + $0x218] sm:$0xff]
        %v1838 = vld [vmem:[#allocation7 + $0x230] sm:$0xff]
        %v1839 = vld [vmem:[#allocation7 + $0x238] sm:$0xff]
        %v1840 = vld [vmem:[#allocation7 + $0x250] sm:$0xff]
        %v1841 = vld [vmem:[#allocation7 + $0x258] sm:$0xff]
        %v1842 = vld [vmem:[#allocation7 + $0x270] sm:$0xff]
        %v1843 = vld [vmem:[#allocation7 + $0x278] sm:$0xff]
        %v1844 = vld [vmem:[#allocation7 + $0x290] sm:$0xff]
        %v1845 = vld [vmem:[#allocation7 + $0x298] sm:$0xff]
        %v1846 = vld [vmem:[#allocation7 + $0x2b0] sm:$0xff]
        %v1847 = vld [vmem:[#allocation7 + $0x2b8] sm:$0xff]
        %v1848 = vld [vmem:[#allocation7 + $0x2d0] sm:$0xff]
        %v1849 = vld [vmem:[#allocation7 + $0x2d8] sm:$0xff]
        %v1850 = vld [vmem:[#allocation7 + $0x2f0] sm:$0xff]
        %v1851 = vld [vmem:[#allocation7 + $0x2f8] sm:$0xff]
        %v1852 = vld [vmem:[#allocation7 + $0x310] sm:$0xff]
        %v1853 = vld [vmem:[#allocation7 + $0x318] sm:$0xff]
        %v1854 = vld [vmem:[#allocation7 + $0x330] sm:$0xff]
        %v1855 = vld [vmem:[#allocation7 + $0x338] sm:$0xff]
        %v1856 = vld [vmem:[#allocation7 + $0x350] sm:$0xff]
        %v1857 = vld [vmem:[#allocation7 + $0x358] sm:$0xff]
        %v1858 = vld [vmem:[#allocation7 + $0x370] sm:$0xff]
        %v1859 = vld [vmem:[#allocation7 + $0x378] sm:$0xff]
        %v1860 = vld [vmem:[#allocation7 + $0x390] sm:$0xff]
        %v1861 = vld [vmem:[#allocation7 + $0x398] sm:$0xff]
        %v1862 = vld [vmem:[#allocation7 + $0x3b0] sm:$0xff]
        %v1863 = vld [vmem:[#allocation7 + $0x3b8] sm:$0xff]
        %v1864 = vld [vmem:[#allocation7 + $0x3d0] sm:$0xff]
        %v1865 = vld [vmem:[#allocation7 + $0x3d8] sm:$0xff]
        %v1866 = vld [vmem:[#allocation7 + $0x3f0] sm:$0xff]
        %v1867 = vld [vmem:[#allocation7 + $0x3f8] sm:$0xff]
        %v1868 = vld [vmem:[%s4 + $0x4] sm:$0xf]
        %v1870 = vlaneseq
        %v1871 = vshrl.u32 %v1870, 7
        %v1872 = vsub.s32 0, %v1871
        %v1873 = vrot.slane %v1868, %v1872
        %v1874 = vlaneseq
        %v1875 = vshrl.u32 %v1874, 7
        %v1876 = vsub.s32 1, %v1875
        %v1877 = vrot.slane %v1868, %v1876
        %v1878 = vlaneseq
        %v1879 = vshrl.u32 %v1878, 7
        %v1880 = vsub.s32 2, %v1879
        %v1881 = vrot.slane %v1868, %v1880
        %v1882 = vlaneseq
        %v1883 = vshrl.u32 %v1882, 7
        %v1884 = vsub.s32 3, %v1883
        %v1885 = vrot.slane %v1868, %v1884
        %v1954 = vunpack.c.l.b16 %v1804
        %v1955 = vunpack.c.h.b16 %v1804
        %v1956 = vunpack.c.l.b16 %v1805
        %v1957 = vunpack.c.h.b16 %v1805
        %v1958 = vunpack.c.l.b16 %v1806
        %v1959 = vunpack.c.h.b16 %v1806
        %v1960 = vunpack.c.l.b16 %v1807
        %v1961 = vunpack.c.h.b16 %v1807
        %v1962 = vunpack.c.l.b16 %v1808
        %v1963 = vunpack.c.h.b16 %v1808
        %v1964 = vunpack.c.l.b16 %v1809
        %v1965 = vunpack.c.h.b16 %v1809
        %v1966 = vunpack.c.l.b16 %v1810
        %v1967 = vunpack.c.h.b16 %v1810
        %v1968 = vunpack.c.l.b16 %v1811
        %v1969 = vunpack.c.h.b16 %v1811
        %v1970 = vunpack.c.l.b16 %v1812
        %v1971 = vunpack.c.h.b16 %v1812
        %v1972 = vunpack.c.l.b16 %v1813
        %v1973 = vunpack.c.h.b16 %v1813
        %v1974 = vunpack.c.l.b16 %v1814
        %v1975 = vunpack.c.h.b16 %v1814
        %v1976 = vunpack.c.l.b16 %v1815
        %v1977 = vunpack.c.h.b16 %v1815
        %v1978 = vunpack.c.l.b16 %v1816
        %v1979 = vunpack.c.h.b16 %v1816
        %v1980 = vunpack.c.l.b16 %v1817
        %v1981 = vunpack.c.h.b16 %v1817
        %v1982 = vunpack.c.l.b16 %v1818
        %v1983 = vunpack.c.h.b16 %v1818
        %v1984 = vunpack.c.l.b16 %v1819
        %v1985 = vunpack.c.h.b16 %v1819
        %v1986 = vunpack.c.l.b16 %v1820
        %v1987 = vunpack.c.h.b16 %v1820
        %v1988 = vunpack.c.l.b16 %v1821
        %v1989 = vunpack.c.h.b16 %v1821
        %v1990 = vunpack.c.l.b16 %v1822
        %v1991 = vunpack.c.h.b16 %v1822
        %v1992 = vunpack.c.l.b16 %v1823
        %v1993 = vunpack.c.h.b16 %v1823
        %v1994 = vunpack.c.l.b16 %v1824
        %v1995 = vunpack.c.h.b16 %v1824
        %v1996 = vunpack.c.l.b16 %v1825
        %v1997 = vunpack.c.h.b16 %v1825
        %v1998 = vunpack.c.l.b16 %v1826
        %v1999 = vunpack.c.h.b16 %v1826
        %v2000 = vunpack.c.l.b16 %v1827
        %v2001 = vunpack.c.h.b16 %v1827
        %v2002 = vunpack.c.l.b16 %v1828
        %v2003 = vunpack.c.h.b16 %v1828
        %v2004 = vunpack.c.l.b16 %v1829
        %v2005 = vunpack.c.h.b16 %v1829
        %v2006 = vunpack.c.l.b16 %v1830
        %v2007 = vunpack.c.h.b16 %v1830
        %v2008 = vunpack.c.l.b16 %v1831
        %v2009 = vunpack.c.h.b16 %v1831
        %v2010 = vunpack.c.l.b16 %v1832
        %v2011 = vunpack.c.h.b16 %v1832
        %v2012 = vunpack.c.l.b16 %v1833
        %v2013 = vunpack.c.h.b16 %v1833
        %v2014 = vunpack.c.l.b16 %v1834
        %v2015 = vunpack.c.h.b16 %v1834
        %v2016 = vunpack.c.l.b16 %v1835
        %v2017 = vunpack.c.h.b16 %v1835
        %v2018 = vunpack.c.l.b16 %v1836
        %v2019 = vunpack.c.h.b16 %v1836
        %v2020 = vunpack.c.l.b16 %v1837
        %v2021 = vunpack.c.h.b16 %v1837
        %v2022 = vunpack.c.l.b16 %v1838
        %v2023 = vunpack.c.h.b16 %v1838
        %v2024 = vunpack.c.l.b16 %v1839
        %v2025 = vunpack.c.h.b16 %v1839
        %v2026 = vunpack.c.l.b16 %v1840
        %v2027 = vunpack.c.h.b16 %v1840
        %v2028 = vunpack.c.l.b16 %v1841
        %v2029 = vunpack.c.h.b16 %v1841
        %v2030 = vunpack.c.l.b16 %v1842
        %v2031 = vunpack.c.h.b16 %v1842
        %v2032 = vunpack.c.l.b16 %v1843
        %v2033 = vunpack.c.h.b16 %v1843
        %v2034 = vunpack.c.l.b16 %v1844
        %v2035 = vunpack.c.h.b16 %v1844
        %v2036 = vunpack.c.l.b16 %v1845
        %v2037 = vunpack.c.h.b16 %v1845
        %v2038 = vunpack.c.l.b16 %v1846
        %v2039 = vunpack.c.h.b16 %v1846
        %v2040 = vunpack.c.l.b16 %v1847
        %v2041 = vunpack.c.h.b16 %v1847
        %v2042 = vunpack.c.l.b16 %v1848
        %v2043 = vunpack.c.h.b16 %v1848
        %v2044 = vunpack.c.l.b16 %v1849
        %v2045 = vunpack.c.h.b16 %v1849
        %v2046 = vunpack.c.l.b16 %v1850
        %v2047 = vunpack.c.h.b16 %v1850
        %v2048 = vunpack.c.l.b16 %v1851
        %v2049 = vunpack.c.h.b16 %v1851
        %v2050 = vunpack.c.l.b16 %v1852
        %v2051 = vunpack.c.h.b16 %v1852
        %v2052 = vunpack.c.l.b16 %v1853
        %v2053 = vunpack.c.h.b16 %v1853
        %v2054 = vunpack.c.l.b16 %v1854
        %v2055 = vunpack.c.h.b16 %v1854
        %v2056 = vunpack.c.l.b16 %v1855
        %v2057 = vunpack.c.h.b16 %v1855
        %v2058 = vunpack.c.l.b16 %v1856
        %v2059 = vunpack.c.h.b16 %v1856
        %v2060 = vunpack.c.l.b16 %v1857
        %v2061 = vunpack.c.h.b16 %v1857
        %v2062 = vunpack.c.l.b16 %v1858
        %v2063 = vunpack.c.h.b16 %v1858
        %v2064 = vunpack.c.l.b16 %v1859
        %v2065 = vunpack.c.h.b16 %v1859
        %v2066 = vunpack.c.l.b16 %v1860
        %v2067 = vunpack.c.h.b16 %v1860
        %v2068 = vunpack.c.l.b16 %v1861
        %v2069 = vunpack.c.h.b16 %v1861
        %v2070 = vunpack.c.l.b16 %v1862
        %v2071 = vunpack.c.h.b16 %v1862
        %v2072 = vunpack.c.l.b16 %v1863
        %v2073 = vunpack.c.h.b16 %v1863
        %v2074 = vunpack.c.l.b16 %v1864
        %v2075 = vunpack.c.h.b16 %v1864
        %v2076 = vunpack.c.l.b16 %v1865
        %v2077 = vunpack.c.h.b16 %v1865
        %v2078 = vunpack.c.l.b16 %v1866
        %v2079 = vunpack.c.h.b16 %v1866
        %v2080 = vunpack.c.l.b16 %v1867
        %v2081 = vunpack.c.h.b16 %v1867
        %v2082 = vpack.c.b16 %v1958, %v1954
        %v2083 = vpack.c.b16 %v1959, %v1955
        %v2084 = vpack.c.b16 %v1960, %v1956
        %v2085 = vpack.c.b16 %v1961, %v1957
        %v2086 = vpack.c.b16 %v1966, %v1962
        %v2087 = vpack.c.b16 %v1967, %v1963
        %v2088 = vpack.c.b16 %v1968, %v1964
        %v2089 = vpack.c.b16 %v1969, %v1965
        %v2090 = vpack.c.b16 %v1974, %v1970
        %v2091 = vpack.c.b16 %v1975, %v1971
        %v2092 = vpack.c.b16 %v1976, %v1972
        %v2093 = vpack.c.b16 %v1977, %v1973
        %v2094 = vpack.c.b16 %v1982, %v1978
        %v2095 = vpack.c.b16 %v1983, %v1979
        %v2096 = vpack.c.b16 %v1984, %v1980
        %v2097 = vpack.c.b16 %v1985, %v1981
        %v2098 = vpack.c.b16 %v1990, %v1986
        %v2099 = vpack.c.b16 %v1991, %v1987
        %v2100 = vpack.c.b16 %v1992, %v1988
        %v2101 = vpack.c.b16 %v1993, %v1989
        %v2102 = vpack.c.b16 %v1998, %v1994
        %v2103 = vpack.c.b16 %v1999, %v1995
        %v2104 = vpack.c.b16 %v2000, %v1996
        %v2105 = vpack.c.b16 %v2001, %v1997
        %v2106 = vpack.c.b16 %v2006, %v2002
        %v2107 = vpack.c.b16 %v2007, %v2003
        %v2108 = vpack.c.b16 %v2008, %v2004
        %v2109 = vpack.c.b16 %v2009, %v2005
        %v2110 = vpack.c.b16 %v2014, %v2010
        %v2111 = vpack.c.b16 %v2015, %v2011
        %v2112 = vpack.c.b16 %v2016, %v2012
        %v2113 = vpack.c.b16 %v2017, %v2013
        %v2114 = vpack.c.b16 %v2022, %v2018
        %v2115 = vpack.c.b16 %v2023, %v2019
        %v2116 = vpack.c.b16 %v2024, %v2020
        %v2117 = vpack.c.b16 %v2025, %v2021
        %v2118 = vpack.c.b16 %v2030, %v2026
        %v2119 = vpack.c.b16 %v2031, %v2027
        %v2120 = vpack.c.b16 %v2032, %v2028
        %v2121 = vpack.c.b16 %v2033, %v2029
        %v2122 = vpack.c.b16 %v2038, %v2034
        %v2123 = vpack.c.b16 %v2039, %v2035
        %v2124 = vpack.c.b16 %v2040, %v2036
        %v2125 = vpack.c.b16 %v2041, %v2037
        %v2126 = vpack.c.b16 %v2046, %v2042
        %v2127 = vpack.c.b16 %v2047, %v2043
        %v2128 = vpack.c.b16 %v2048, %v2044
        %v2129 = vpack.c.b16 %v2049, %v2045
        %v2130 = vpack.c.b16 %v2054, %v2050
        %v2131 = vpack.c.b16 %v2055, %v2051
        %v2132 = vpack.c.b16 %v2056, %v2052
        %v2133 = vpack.c.b16 %v2057, %v2053
        %v2134 = vpack.c.b16 %v2062, %v2058
        %v2135 = vpack.c.b16 %v2063, %v2059
        %v2136 = vpack.c.b16 %v2064, %v2060
        %v2137 = vpack.c.b16 %v2065, %v2061
        %v2138 = vpack.c.b16 %v2070, %v2066
        %v2139 = vpack.c.b16 %v2071, %v2067
        %v2140 = vpack.c.b16 %v2072, %v2068
        %v2141 = vpack.c.b16 %v2073, %v2069
        %v2142 = vpack.c.b16 %v2078, %v2074
        %v2143 = vpack.c.b16 %v2079, %v2075
        %v2144 = vpack.c.b16 %v2080, %v2076
        %v2145 = vpack.c.b16 %v2081, %v2077
        %2210 = vmatprep.subr.bf16.mxu0 %v2083
        %2211 = vmatpush1.bf16.msra.mxu0 %v2082
        %2212 = vmatprep.subr.bf16.mxu0 %v2087
        %2213 = vmatpush1.bf16.msra.mxu0 %v2086
        %2214 = vmatprep.subr.bf16.mxu0 %v2091
        %2215 = vmatpush1.bf16.msra.mxu0 %v2090
        %2216 = vmatprep.subr.bf16.mxu0 %v2095
        %2217 = vmatpush1.bf16.msra.mxu0 %v2094
        %2218 = vmatprep.subr.bf16.mxu0 %v2099
        %2219 = vmatpush1.bf16.msra.mxu0 %v2098
        %2220 = vmatprep.subr.bf16.mxu0 %v2103
        %2221 = vmatpush1.bf16.msra.mxu0 %v2102
        %2222 = vmatprep.subr.bf16.mxu0 %v2107
        %2223 = vmatpush1.bf16.msra.mxu0 %v2106
        %2224 = vmatprep.subr.bf16.mxu0 %v2111
        %2225 = vmatpush1.bf16.msra.mxu0 %v2110
        %2226 = vmatprep.subr.bf16.mxu0 %v2115
        %2227 = vmatpush1.bf16.msra.mxu0 %v2114
        %2228 = vmatprep.subr.bf16.mxu0 %v2119
        %2229 = vmatpush1.bf16.msra.mxu0 %v2118
        %2230 = vmatprep.subr.bf16.mxu0 %v2123
        %2231 = vmatpush1.bf16.msra.mxu0 %v2122
        %2232 = vmatprep.subr.bf16.mxu0 %v2127
        %2233 = vmatpush1.bf16.msra.mxu0 %v2126
        %2234 = vmatprep.subr.bf16.mxu0 %v2131
        %2235 = vmatpush1.bf16.msra.mxu0 %v2130
        %2236 = vmatprep.subr.bf16.mxu0 %v2135
        %2237 = vmatpush1.bf16.msra.mxu0 %v2134
        %2238 = vmatprep.subr.bf16.mxu0 %v2139
        %2239 = vmatpush1.bf16.msra.mxu0 %v2138
        %2240 = vmatprep.subr.bf16.mxu0 %v2143
        %2241 = vmatpush1.bf16.msra.mxu0 %v2142
        %2242 = vmatprep.mubr.bf16.mxu0 %v1295
        %2243 = vmatmul.mubr.bf16.gmra.mrb[0].mxu0 %v1294
        %v2244 = vpop.f32.mrb[0].mxu0
        %v2245 = vadd.f32 %v1873, %v2244
        %v2246 = vpop.f32.mrb[0].mxu0
        %v2247 = vadd.f32 %v1877, %v2246
        %v2248 = vpop.f32.mrb[0].mxu0
        %v2249 = vadd.f32 %v1873, %v2248
        %v2250 = vpop.f32.mrb[0].mxu0
        %v2251 = vadd.f32 %v1877, %v2250
        %2252 = vdwg.mxu0
        %2253 = vmatprep.subr.bf16.mxu0 %v2085
        %2254 = vmatpush1.bf16.msra.mxu0 %v2084
        %2255 = vmatprep.subr.bf16.mxu0 %v2089
        %2256 = vmatpush1.bf16.msra.mxu0 %v2088
        %2257 = vmatprep.subr.bf16.mxu0 %v2093
        %2258 = vmatpush1.bf16.msra.mxu0 %v2092
        %2259 = vmatprep.subr.bf16.mxu0 %v2097
        %2260 = vmatpush1.bf16.msra.mxu0 %v2096
        %2261 = vmatprep.subr.bf16.mxu0 %v2101
        %2262 = vmatpush1.bf16.msra.mxu0 %v2100
        %2263 = vmatprep.subr.bf16.mxu0 %v2105
        %2264 = vmatpush1.bf16.msra.mxu0 %v2104
        %2265 = vmatprep.subr.bf16.mxu0 %v2109
        %2266 = vmatpush1.bf16.msra.mxu0 %v2108
        %2267 = vmatprep.subr.bf16.mxu0 %v2113
        %2268 = vmatpush1.bf16.msra.mxu0 %v2112
        %2269 = vmatprep.subr.bf16.mxu0 %v2117
        %2270 = vmatpush1.bf16.msra.mxu0 %v2116
        %2271 = vmatprep.subr.bf16.mxu0 %v2121
        %2272 = vmatpush1.bf16.msra.mxu0 %v2120
        %2273 = vmatprep.subr.bf16.mxu0 %v2125
        %2274 = vmatpush1.bf16.msra.mxu0 %v2124
        %2275 = vmatprep.subr.bf16.mxu0 %v2129
        %2276 = vmatpush1.bf16.msra.mxu0 %v2128
        %2277 = vmatprep.subr.bf16.mxu0 %v2133
        %2278 = vmatpush1.bf16.msra.mxu0 %v2132
        %2279 = vmatprep.subr.bf16.mxu0 %v2137
        %2280 = vmatpush1.bf16.msra.mxu0 %v2136
        %2281 = vmatprep.subr.bf16.mxu0 %v2141
        %2282 = vmatpush1.bf16.msra.mxu0 %v2140
        %2283 = vmatprep.subr.bf16.mxu0 %v2145
        %2284 = vmatpush1.bf16.msra.mxu0 %v2144
        %2285 = vmatprep.mubr.bf16.mxu0 %v1295
        %2286 = vmatmul.mubr.bf16.gmra.mrb[0].mxu0 %v1294
        %v2287 = vpop.f32.mrb[0].mxu0
        %v2288 = vadd.f32 %v1881, %v2287
        %v2289 = vpop.f32.mrb[0].mxu0
        %v2290 = vadd.f32 %v1885, %v2289
        %v2291 = vpop.f32.mrb[0].mxu0
        %v2292 = vadd.f32 %v1881, %v2291
        %v2293 = vpop.f32.mrb[0].mxu0
        %v2294 = vadd.f32 %v1885, %v2293
        %2295 = vdwg.mxu0
        %v2296 = vmax.f32 %v2245, 0.0
        %v2297 = vmax.f32 %v2247, 0.0
        %v2298 = vmax.f32 %v2288, 0.0
        %v2299 = vmax.f32 %v2290, 0.0
        %v2300 = vmax.f32 %v2249, 0.0
        %v2301 = vmax.f32 %v2251, 0.0
        %v2302 = vmax.f32 %v2292, 0.0
        %v2303 = vmax.f32 %v2294, 0.0
        %2304 = vst [vmem:[%s310] sm:$0xff] %v2296
        %2305 = vst [vmem:[%s310 + $0x8] sm:$0xff] %v2297
        %2306 = vst [vmem:[%s310 + $0x10] sm:$0xff] %v2298
        %2307 = vst [vmem:[%s310 + $0x18] sm:$0xff] %v2299
        %2308 = vst [vmem:[%s310 + $0x20] sm:$0xff] %v2300
        %2309 = vst [vmem:[%s310 + $0x28] sm:$0xff] %v2301
        %2310 = vst [vmem:[%s310 + $0x30] sm:$0xff] %v2302
        %2311 = vst [vmem:[%s310 + $0x38] sm:$0xff] %v2303
        %s2312 = sand.u32 %s146, 1
        %s2313 = scalar_lea.sflag [#allocation4], %s2312
        %s2314 = sand.u32 %s146, 1
        %s2315 = smul.addr %s2314, 64
        %s2316 = scalar_lea.vmem [#allocation8], %s2315
        %s2317 = sand.u32 %s172, 1
        %s2318 = scalar_lea.sflag [#allocation10], %s2317
        %s2319 = sand.u32 %s172, 1
        %s2320 = smul.addr %s2319, 64
        %s2321 = scalar_lea.vmem [#allocation9], %s2320
        // Predicated region
        $region53: #{adapter_forward.1} parent=39 // pred_check
          %p2322 = pneg %p156
        $region54: #{adapter_forward.1} parent=39 // pred_check_branch
          %2324 = sbr.rel (%p2322) target = $region56
        $region55: #{adapter_forward.1} parent=39 // pred_region
          %s2325 = smul.u32 2, %s28
          %s2327 = ssub.s32 1024, 1024
          %2328 = vsyncadd %s2313, %s2327
          %s2329 = smul.addr %s2325, 4
          %s2330 = smul.addr %s2329, 128
          %s2331 = scalar_lea.hbm %s5, %s2330
          %s2332 = sshll.u32 %s2316, 4
          %s2333 = int_to_ptr.vmem [resolvable:$true] %s2332
          %2338 = dma.vmem_to_hbm [thread:$0]  %s2333, 1024, %s2331, %s2313, 512, 512, 32
        $region56: #{adapter_forward.1} parent=39 // pred_fallthru
          _
        // Predicated region
        $region57: #{adapter_forward.1} parent=39 // pred_check
          %p2339 = pneg %p182
        $region58: #{adapter_forward.1} parent=39 // pred_check_branch
          %2341 = sbr.rel (%p2339) target = $region60
        $region59: #{adapter_forward.1} parent=39 // pred_region
          %s2342 = smul.u32 2, %s28
          %s2344 = ssub.s32 1024, 1024
          %2345 = vsyncadd %s2318, %s2344
          %s2346 = smul.addr %s2342, 4
          %s2347 = smul.addr %s2346, 128
          %s2348 = scalar_lea.hbm %s6, %s2347
          %s2349 = sshll.u32 %s2321, 4
          %s2350 = int_to_ptr.vmem [resolvable:$true] %s2349
          %2355 = dma.vmem_to_hbm [thread:$0]  %s2350, 1024, %s2348, %s2318, 512, 512, 32
        $region60: #{adapter_forward.1} parent=39 // pred_fallthru
          _
      $region40: #{adapter_forward.1} parent=5 // pred_fallthru
        _
      %p2356 = scmp.le.s32.totalorder 2, %s23
      // Predicated region
      $region61: #{adapter_forward.1} parent=5 // pred_check
        %p2357 = pneg %p2356
      $region62: #{adapter_forward.1} parent=5 // pred_check_branch
        %2359 = sbr.rel (%p2357) target = $region64
      $region63: #{adapter_forward.1} parent=5 // pred_region
        %s2360 = ssub.s32 %s23, 2
        // Predicated region
        $region65: #{adapter_forward.1} parent=63 // pred_check
          %p2361 = pneg %p162
        $region66: #{adapter_forward.1} parent=63 // pred_check_branch
          %2363 = sbr.rel (%p2361) target = $region68
        $region67: #{adapter_forward.1} parent=63 // pred_region
          %s2364 = sand.u32 %s147, 1
          %s2365 = scalar_lea.sflag [#allocation4], %s2364
          %s2366 = sand.u32 %s147, 1
          %s2367 = smul.addr %s2366, 64
          %s2368 = scalar_lea.vmem [#allocation8], %s2367
          %2369 = dma.done %s2365, 1024
        $region68: #{adapter_forward.1} parent=63 // pred_fallthru
          _
        // Predicated region
        $region69: #{adapter_forward.1} parent=63 // pred_check
          %p2370 = pneg %p188
        $region70: #{adapter_forward.1} parent=63 // pred_check_branch
          %2372 = sbr.rel (%p2370) target = $region72
        $region71: #{adapter_forward.1} parent=63 // pred_region
          %s2373 = sand.u32 %s173, 1
          %s2374 = scalar_lea.sflag [#allocation10], %s2373
          %s2375 = sand.u32 %s173, 1
          %s2376 = smul.addr %s2375, 64
          %s2377 = scalar_lea.vmem [#allocation9], %s2376
          %2378 = dma.done %s2374, 1024
        $region72: #{adapter_forward.1} parent=63 // pred_fallthru
          _
      $region64: #{adapter_forward.1} parent=5 // pred_fallthru
        _
    $region6: #{adapter_forward.1} parent=1 // loop_footer
      %s27 = sadd.s32 1, %s23
    $region7: #{adapter_forward.1} parent=1 // loop_footer_branch
      %22 = sbr.rel target = $region3
    $region8: #{adapter_forward.1} parent=1 // loop_exit
      _
    %2379 = vsyncpa [#allocation3], 1
    %s2380 = scalar_lea.sflag [#allocation3], 1
    %2381 = vsyncpa %s2380, 1
    %2382 = vsyncpa [#allocation6], 1
    %2383 = vsyncpa [#allocation4], 1
    %s2384 = scalar_lea.sflag [#allocation4], 1
    %2385 = vsyncpa %s2384, 1
    %2386 = vsyncpa [#allocation10], 1
    %s2387 = scalar_lea.sflag [#allocation10], 1
    %2388 = vsyncpa %s2387, 1

</llo_original>
